<compile_context>
chip_gen: v5e
topology: v5e:2x2
jax: 0.10.0
libtpu: 0.0.40
codegen_flags: <defaults>
</compile_context>

<pallas_src>
import functools

import jax
import jax.numpy as jnp
from jax import lax
from jax.experimental import pallas as pl
from jax.experimental.pallas import tpu as pltpu


# ----------------------------------------------------------------------------
# Fused kernel
# ----------------------------------------------------------------------------
def _bottleneck_fused_kernel(x_ref, w1_ref, w2_ref, b2_ref, w3_ref, b3_ref,
                             o_ref, h1_ref, *, stride, th, Wp, W_out,
                             use_res, s1_rows):
    in_rows = (th - 1) * stride + 3          # padded input rows needed by tile
    L1 = in_rows * Wp                        # flat length of the stage-1 slab
    hid = w3_ref.shape[0]

    i = pl.program_id(1)
    row_step = th * stride * Wp
    row0 = i * row_step                      # flat offset of the tile's first padded row
    if row_step % 8 == 0:
        row0 = pl.multiple_of(row0, 8)

    # ---- Stage 1: 1x1 expand (+BN shift via indicator channel) + ReLU6 -----
    # ONE batched matmul over the whole tile.  Padded positions have x=0 and
    # indicator=0, so the result there is exactly 0 (true zero padding for the
    # depthwise conv).
    xa = x_ref[0, pl.ds(row0, L1), :]                                # (L1, Cin+1)
    h1 = jnp.clip(jnp.dot(xa, w1_ref[...],
                          preferred_element_type=jnp.float32), 0.0, 6.0)
    h1_ref[pl.ds(0, L1), :] = h1
    pad_rows = s1_rows - L1
    if pad_rows > 0:                         # deterministic tail (stride=1 slab
        h1_ref[pl.ds(L1, pad_rows), :] = jnp.zeros((pad_rows, hid), jnp.float32)
        # reads overrun into these rows only at discarded garbage columns)

    w2 = w2_ref[...]                         # (9, hid), BN scale pre-folded
    b2 = b2_ref[...]                         # (1, hid)
    w3 = w3_ref[...]                         # (hid, Cout), BN scale pre-folded
    b3 = b3_ref[...]                         # (1, Cout)

    # ---- Stage 2: depthwise 3x3 (+stride) + BN + ReLU6 ----------------------
    if stride == 1:
        # Fully batched: 9 contiguous slab FMAs at static offsets.  The acc is
        # kept in flat (row, padded-col) form; the last 2 columns of each row
        # are garbage (wrap-around) and are sliced away in the wrapper.
        L_out = th * Wp
        taps = [w2[k:k + 1, :] for k in range(9)]                    # hoisted
        acc = None
        for dy in range(3):
            for dx in range(3):
                term = h1_ref[pl.ds(dy * Wp + dx, L_out), :] * taps[dy * 3 + dx]
                acc = term if acc is None else acc + term
        h2 = jnp.clip(acc + b2, 0.0, 6.0)                            # (L_out, hid)
    else:
        # stride=2: per-output-row strided column reads (endorsed
        # ref[pl.ds(..., stride=2)] pattern), but the project matmul and the
        # store below are still batched over the whole tile.
        L_out = th * W_out
        taps = [jnp.broadcast_to(w2[k:k + 1, :], (W_out, hid)) for k in range(9)]
        rows = []
        for r in range(th):
            acc = None
            for dy in range(3):
                base = (2 * r + dy) * Wp
                for dx in range(3):
                    term = h1_ref[pl.ds(base + dx, W_out, stride=2), :] \
                        * taps[dy * 3 + dx]
                    acc = term if acc is None else acc + term
            rows.append(jnp.clip(acc + b2, 0.0, 6.0))
        h2 = jnp.concatenate(rows, axis=0)                           # (L_out, hid)

    # ---- Stage 3: 1x1 project + BN (+ residual) -----------------------------
    y = jnp.dot(h2, w3, preferred_element_type=jnp.float32) + b3     # (L_out, Cout)
    if use_res:
        # use_res implies stride == 1 and Cin == Cout: reuse the resident x
        # slab (rows offset by +1, cols offset by +1 in the padded image).
        res = x_ref[0, pl.ds(row0 + Wp + 1, L_out), :]               # (L_out, Cin+1)
        y = y + res[:, :y.shape[1]]
    o_ref[0, 0, :, :] = y.astype(o_ref.dtype)                        # one store/tile


# ----------------------------------------------------------------------------
# Wrapper: BN folding, layout plumbing, pallas_call
# ----------------------------------------------------------------------------
def _bn_scale_shift(gamma, beta, mean, var, eps=1e-5):
    scale = gamma / jnp.sqrt(var + eps)
    shift = beta - mean * scale
    return scale.reshape(1, -1), shift.reshape(1, -1)


def _pick_row_tile(h_out, cap):
    for t in range(min(cap, h_out), 0, -1):
        if h_out % t == 0:
            return t
    return 1


def bottleneck_forward(x_nchw, params, *, in_channel, out_channel, stride,
                       row_tile=8):
    assert stride in (1, 2)
    use_res = (stride == 1) and (in_channel == out_channel)

    N, Cin, H, W = x_nchw.shape
    hid = params["w1"].shape[1]
    Cout = params["w3"].shape[1]

    s1, b1 = _bn_scale_shift(*params["bn1"])
    s2, b2 = _bn_scale_shift(*params["bn2"])
    s3, b3 = _bn_scale_shift(*params["bn3"])

    # Fold BN scales into the conv weights; fold shift1 into an augmented
    # weight row driven by the indicator channel.
    w1_aug = jnp.concatenate([params["w1"] * s1, b1], axis=0)        # (Cin+1, hid)
    w2s = (params["w2"] * s2.reshape(1, 1, hid)).reshape(9, hid)     # (9, hid)
    w3s = params["w3"] * s3                                          # (hid, Cout)

    Hp, Wp = H + 2, W + 2
    H_out = (H - 1) // stride + 1
    W_out = (W - 1) // stride + 1
    th = _pick_row_tile(H_out, row_tile)     # th | H_out -> no ragged tiles
    n_tiles = H_out // th
    in_rows = (th - 1) * stride + 3
    Wrow = Wp if stride == 1 else W_out      # columns produced per output row
    S_out = th * Wrow                        # flat output rows per tile
    L1 = in_rows * Wp
    extra = 2 if stride == 1 else 0          # stride-1 slab reads overrun by <=2
    s1_rows = ((L1 + extra + 7) // 8) * 8    # sublane-aligned scratch rows

    # NCHW -> NHWC, append the padding-indicator channel, zero-pad, flatten
    # spatial so per-tile slabs are contiguous along the sublane axis.
    x = jnp.transpose(x_nchw, (0, 2, 3, 1)).astype(jnp.float32)
    x_aug = jnp.concatenate([x, jnp.ones((N, H, W, 1), jnp.float32)], axis=-1)
    x_pad = jnp.pad(x_aug, ((0, 0), (1, 1), (1, 1), (0, 0)))
    x_in = x_pad.reshape(N, Hp * Wp, Cin + 1)

    kernel = functools.partial(
        _bottleneck_fused_kernel, stride=stride, th=th, Wp=Wp, W_out=W_out,
        use_res=use_res, s1_rows=s1_rows)

    out = pl.pallas_call(
        kernel,
        out_shape=jax.ShapeDtypeStruct((N, n_tiles, S_out, Cout), jnp.float32),
        grid_spec=pltpu.PrefetchScalarGridSpec(
            num_scalar_prefetch=0,
            grid=(N, n_tiles),
            in_specs=[
                pl.BlockSpec((1, Hp * Wp, Cin + 1), lambda n, i: (n, 0, 0)),  # x_aug
                pl.BlockSpec((Cin + 1, hid), lambda n, i: (0, 0)),            # w1*s1 | b1
                pl.BlockSpec((9, hid), lambda n, i: (0, 0)),                  # w2*s2
                pl.BlockSpec((1, hid), lambda n, i: (0, 0)),                  # shift2
                pl.BlockSpec((hid, Cout), lambda n, i: (0, 0)),               # w3*s3
                pl.BlockSpec((1, Cout), lambda n, i: (0, 0)),                 # shift3
            ],
            out_specs=pl.BlockSpec((1, 1, S_out, Cout),
                                   lambda n, i: (n, i, 0, 0)),
            scratch_shapes=[pltpu.VMEM((s1_rows, hid), jnp.float32)],
        ),
        compiler_params=pltpu.CompilerParams(
            dimension_semantics=("parallel", "parallel")),
    )(x_in, w1_aug, w2s, b2, w3s, b3)

    out = out.reshape(N, H_out, Wrow, Cout)
    if stride == 1:
        out = out[:, :, :W, :]               # drop the 2 wrap-around columns
    return jnp.transpose(out, (0, 3, 1, 2))  # NHWC -> NCHW


# ----------------------------------------------------------------------------
# Parameters (deterministic, eval-mode BatchNorm statistics)
# ----------------------------------------------------------------------------
def init_bottleneck_params(key, in_channel, out_channel, expand=6):
    hid = in_channel * expand
    ks = jax.random.split(key, 6)

    def bn_params(k, c):
        k1, k2, k3, k4 = jax.random.split(k, 4)
        gamma = jax.random.uniform(k1, (c,), jnp.float32, 0.5, 1.5)
        beta = 0.1 * jax.random.normal(k2, (c,), jnp.float32)
        mean = 0.1 * jax.random.normal(k3, (c,), jnp.float32)
        var = jax.random.uniform(k4, (c,), jnp.float32, 0.5, 1.5)
        return gamma, beta, mean, var

    return {
        # 1x1 expand conv: PyTorch (hid, in, 1, 1) -> stored as (in, hid)
        "w1": 0.1 * jax.random.normal(ks[0], (in_channel, hid), jnp.float32),
        "bn1": bn_params(ks[1], hid),
        # depthwise 3x3: PyTorch (hid, 1, 3, 3) -> stored as (3, 3, hid)
        "w2": 0.1 * jax.random.normal(ks[2], (3, 3, hid), jnp.float32),
        "bn2": bn_params(ks[3], hid),
        # 1x1 project conv: PyTorch (out, hid, 1, 1) -> stored as (hid, out)
        "w3": 0.1 * jax.random.normal(ks[4], (hid, out_channel), jnp.float32),
        "bn3": bn_params(ks[5], out_channel),
    }


# ----------------------------------------------------------------------------
# Pure-JAX reference (eval-mode BN) for correctness checks
# ----------------------------------------------------------------------------
def bottleneck_reference(x_nchw, params, *, in_channel, out_channel, stride):
    use_res = (stride == 1) and (in_channel == out_channel)
    x = jnp.transpose(x_nchw, (0, 2, 3, 1))
    s1, b1 = _bn_scale_shift(*params["bn1"])
    s2, b2 = _bn_scale_shift(*params["bn2"])
    s3, b3 = _bn_scale_shift(*params["bn3"])
    hid = params["w1"].shape[1]

    h = jnp.clip(jnp.einsum("nhwc,cd->nhwd", x, params["w1"]) * s1 + b1, 0.0, 6.0)
    w_dw = params["w2"].reshape(3, 3, 1, hid)  # HWIO, feature_group_count=hid
    h = lax.conv_general_dilated(
        h, w_dw, window_strides=(stride, stride), padding=((1, 1), (1, 1)),
        dimension_numbers=("NHWC", "HWIO", "NHWC"), feature_group_count=hid)
    h = jnp.clip(h * s2 + b2, 0.0, 6.0)
    h = jnp.einsum("nhwc,cd->nhwd", h, params["w3"]) * s3 + b3
    if use_res:
        h = h + x
    return jnp.transpose(h, (0, 3, 1, 2))


# ----------------------------------------------------------------------------
# Demo
# ----------------------------------------------------------------------------
if __name__ == "__main__":
    key = jax.random.PRNGKey(0)
    kx, kp, kp2 = jax.random.split(key, 3)

    # Case 1: BottleNeck(in=4, out=4, stride=1) -> residual path (use_res=True)
    N, Cin, H, W = 2, 4, 16, 16
    Cout, expand = 4, 6
    x = jax.random.normal(kx, (N, Cin, H, W), jnp.float32)       # PyTorch NCHW input
    params = init_bottleneck_params(kp, Cin, Cout, expand)

    out = bottleneck_forward(x, params, in_channel=Cin, out_channel=Cout, stride=1)
    out = jax.block_until_ready(out)
    ref = bottleneck_reference(x, params, in_channel=Cin, out_channel=Cout, stride=1)
    assert out.shape == (N, Cout, H, W)
    assert jnp.allclose(out, ref, rtol=1e-3, atol=1e-3), "stride=1 mismatch vs reference"

    # Case 2: BottleNeck(in=4, out=8, stride=2) -> downsampling, no residual
    Cout2 = 8
    params2 = init_bottleneck_params(kp2, Cin, Cout2, expand)
    out2 = bottleneck_forward(x, params2, in_channel=Cin, out_channel=Cout2, stride=2)
    out2 = jax.block_until_ready(out2)
    ref2 = bottleneck_reference(x, params2, in_channel=Cin, out_channel=Cout2, stride=2)
    assert out2.shape == (N, Cout2, H // 2, W // 2)
    assert jnp.allclose(out2, ref2, rtol=1e-3, atol=1e-3), "stride=2 mismatch vs reference"

    print("KERNEL_OK")
</pallas_src>

<mosaic_0001>
module attributes {stable_mosaic.version = 11 : i64} {
  func.func @_bottleneck_fused_kernel(%arg0: i32, %arg1: i32, %arg2: memref<1x324x5xf32, #tpu.memory_space<vmem>>, %arg3: memref<5x24xf32, #tpu.memory_space<vmem>>, %arg4: memref<9x24xf32, #tpu.memory_space<vmem>>, %arg5: memref<1x24xf32, #tpu.memory_space<vmem>>, %arg6: memref<24x4xf32, #tpu.memory_space<vmem>>, %arg7: memref<1x4xf32, #tpu.memory_space<vmem>>, %arg8: memref<1x1x144x4xf32, #tpu.memory_space<vmem>>, %arg9: memref<184x24xf32, #tpu.memory_space<vmem>>) attributes {dimension_semantics = [#tpu.dimension_semantics<parallel>, #tpu.dimension_semantics<parallel>], iteration_bounds = array<i64: 2, 2>, scalar_prefetch = 0 : i64, scratch_operands = 1 : i64, tpu.core_type = #tpu.core_type<tc>, window_params = [{transform_indices = @transform_0, window_bounds = array<i64: 1, 324, 5>}, {pipeline_mode = #tpu.pipeline_mode<synchronous>, transform_indices = @transform_1, window_bounds = array<i64: 5, 24>}, {pipeline_mode = #tpu.pipeline_mode<synchronous>, transform_indices = @transform_2, window_bounds = array<i64: 9, 24>}, {pipeline_mode = #tpu.pipeline_mode<synchronous>, transform_indices = @transform_3, window_bounds = array<i64: 1, 24>}, {pipeline_mode = #tpu.pipeline_mode<synchronous>, transform_indices = @transform_4, window_bounds = array<i64: 24, 4>}, {pipeline_mode = #tpu.pipeline_mode<synchronous>, transform_indices = @transform_5, window_bounds = array<i64: 1, 4>}, {transform_indices = @transform_6, window_bounds = array<i64: 1, 1, 144, 4>}]} {
    %c144_i32 = arith.constant 144 : i32
    %0 = arith.muli %arg1, %c144_i32 : i32
    %1 = tpu.assume_multiple %0, 8 : i32
    %c0 = arith.constant 0 : index
    %2 = arith.index_cast %1 : i32 to index
    %c0_0 = arith.constant 0 : index
    %3 = vector.load %arg2[%c0, %2, %c0_0] : memref<1x324x5xf32, #tpu.memory_space<vmem>>, vector<1x180x5xf32>
    %4 = vector.shape_cast %3 : vector<1x180x5xf32> to vector<180x5xf32>
    %c0_1 = arith.constant 0 : index
    %c0_2 = arith.constant 0 : index
    %5 = vector.load %arg3[%c0_1, %c0_2] : memref<5x24xf32, #tpu.memory_space<vmem>>, vector<5x24xf32>
    %cst = arith.constant dense<0.000000e+00> : vector<180x24xf32>
    %6 = tpu.matmul %4, %5, %cst {dimension_numbers = #tpu.dot_dimension_numbers<[1], [0], [0], [1], [0, 0, 1, 1], [], []>} : vector<180x5xf32>, vector<5x24xf32>, vector<180x24xf32> -> vector<180x24xf32>
    %cst_3 = arith.constant 0.000000e+00 : f32
    %cst_4 = arith.constant 6.000000e+00 : f32
    %7 = vector.broadcast %cst_3 : f32 to vector<180x24xf32>
    %8 = arith.maximumf %7, %6 : vector<180x24xf32>
    %9 = vector.broadcast %cst_4 : f32 to vector<180x24xf32>
    %10 = arith.minimumf %9, %8 : vector<180x24xf32>
    %c0_5 = arith.constant 0 : index
    %c0_6 = arith.constant 0 : index
    %11 = vector.load %arg9[%c0_5, %c0_6] : memref<184x24xf32, #tpu.memory_space<vmem>>, vector<180x24xf32>
    tpu.vector_store %arg9[%c0_5, %c0_6], %10 {strides = array<i32>} : memref<184x24xf32, #tpu.memory_space<vmem>>, vector<180x24xf32>,
    %cst_7 = arith.constant 0.000000e+00 : f32
    %12 = vector.broadcast %cst_7 : f32 to vector<4x24xf32>
    %c180 = arith.constant 180 : index
    %c0_8 = arith.constant 0 : index
    %13 = vector.load %arg9[%c180, %c0_8] : memref<184x24xf32, #tpu.memory_space<vmem>>, vector<4x24xf32>
    tpu.vector_store %arg9[%c180, %c0_8], %12 {strides = array<i32>} : memref<184x24xf32, #tpu.memory_space<vmem>>, vector<4x24xf32>,
    %c0_9 = arith.constant 0 : index
    %c0_10 = arith.constant 0 : index
    %14 = vector.load %arg4[%c0_9, %c0_10] : memref<9x24xf32, #tpu.memory_space<vmem>>, vector<9x24xf32>
    %c0_11 = arith.constant 0 : index
    %c0_12 = arith.constant 0 : index
    %15 = vector.load %arg5[%c0_11, %c0_12] : memref<1x24xf32, #tpu.memory_space<vmem>>, vector<1x24xf32>
    %c0_13 = arith.constant 0 : index
    %c0_14 = arith.constant 0 : index
    %16 = vector.load %arg6[%c0_13, %c0_14] : memref<24x4xf32, #tpu.memory_space<vmem>>, vector<24x4xf32>
    %c0_15 = arith.constant 0 : index
    %c0_16 = arith.constant 0 : index
    %17 = vector.load %arg7[%c0_15, %c0_16] : memref<1x4xf32, #tpu.memory_space<vmem>>, vector<1x4xf32>
    %18 = vector.extract_strided_slice %14 {offsets = [0, 0], sizes = [1, 24], strides = [1, 1]} : vector<9x24xf32> to vector<1x24xf32>
    %19 = vector.extract_strided_slice %14 {offsets = [1, 0], sizes = [1, 24], strides = [1, 1]} : vector<9x24xf32> to vector<1x24xf32>
    %20 = vector.extract_strided_slice %14 {offsets = [2, 0], sizes = [1, 24], strides = [1, 1]} : vector<9x24xf32> to vector<1x24xf32>
    %21 = vector.extract_strided_slice %14 {offsets = [3, 0], sizes = [1, 24], strides = [1, 1]} : vector<9x24xf32> to vector<1x24xf32>
    %22 = vector.extract_strided_slice %14 {offsets = [4, 0], sizes = [1, 24], strides = [1, 1]} : vector<9x24xf32> to vector<1x24xf32>
    %23 = vector.extract_strided_slice %14 {offsets = [5, 0], sizes = [1, 24], strides = [1, 1]} : vector<9x24xf32> to vector<1x24xf32>
    %24 = vector.extract_strided_slice %14 {offsets = [6, 0], sizes = [1, 24], strides = [1, 1]} : vector<9x24xf32> to vector<1x24xf32>
    %25 = vector.extract_strided_slice %14 {offsets = [7, 0], sizes = [1, 24], strides = [1, 1]} : vector<9x24xf32> to vector<1x24xf32>
    %26 = vector.extract_strided_slice %14 {offsets = [8, 0], sizes = [1, 24], strides = [1, 1]} : vector<9x24xf32> to vector<1x24xf32>
    %c0_17 = arith.constant 0 : index
    %c0_18 = arith.constant 0 : index
    %27 = vector.load %arg9[%c0_17, %c0_18] : memref<184x24xf32, #tpu.memory_space<vmem>>, vector<144x24xf32>
    %28 = vector.broadcast %18 : vector<1x24xf32> to vector<144x24xf32>
    %29 = arith.mulf %27, %28 : vector<144x24xf32>
    %c1 = arith.constant 1 : index
    %c0_19 = arith.constant 0 : index
    %30 = vector.load %arg9[%c1, %c0_19] : memref<184x24xf32, #tpu.memory_space<vmem>>, vector<144x24xf32>
    %31 = vector.broadcast %19 : vector<1x24xf32> to vector<144x24xf32>
    %32 = arith.mulf %30, %31 : vector<144x24xf32>
    %33 = arith.addf %29, %32 : vector<144x24xf32>
    %c2 = arith.constant 2 : index
    %c0_20 = arith.constant 0 : index
    %34 = vector.load %arg9[%c2, %c0_20] : memref<184x24xf32, #tpu.memory_space<vmem>>, vector<144x24xf32>
    %35 = vector.broadcast %20 : vector<1x24xf32> to vector<144x24xf32>
    %36 = arith.mulf %34, %35 : vector<144x24xf32>
    %37 = arith.addf %33, %36 : vector<144x24xf32>
    %c18 = arith.constant 18 : index
    %c0_21 = arith.constant 0 : index
    %38 = vector.load %arg9[%c18, %c0_21] : memref<184x24xf32, #tpu.memory_space<vmem>>, vector<144x24xf32>
    %39 = vector.broadcast %21 : vector<1x24xf32> to vector<144x24xf32>
    %40 = arith.mulf %38, %39 : vector<144x24xf32>
    %41 = arith.addf %37, %40 : vector<144x24xf32>
    %c19 = arith.constant 19 : index
    %c0_22 = arith.constant 0 : index
    %42 = vector.load %arg9[%c19, %c0_22] : memref<184x24xf32, #tpu.memory_space<vmem>>, vector<144x24xf32>
    %43 = vector.broadcast %22 : vector<1x24xf32> to vector<144x24xf32>
    %44 = arith.mulf %42, %43 : vector<144x24xf32>
    %45 = arith.addf %41, %44 : vector<144x24xf32>
    %c20 = arith.constant 20 : index
    %c0_23 = arith.constant 0 : index
    %46 = vector.load %arg9[%c20, %c0_23] : memref<184x24xf32, #tpu.memory_space<vmem>>, vector<144x24xf32>
    %47 = vector.broadcast %23 : vector<1x24xf32> to vector<144x24xf32>
    %48 = arith.mulf %46, %47 : vector<144x24xf32>
    %49 = arith.addf %45, %48 : vector<144x24xf32>
    %c36 = arith.constant 36 : index
    %c0_24 = arith.constant 0 : index
    %50 = vector.load %arg9[%c36, %c0_24] : memref<184x24xf32, #tpu.memory_space<vmem>>, vector<144x24xf32>
    %51 = vector.broadcast %24 : vector<1x24xf32> to vector<144x24xf32>
    %52 = arith.mulf %50, %51 : vector<144x24xf32>
    %53 = arith.addf %49, %52 : vector<144x24xf32>
    %c37 = arith.constant 37 : index
    %c0_25 = arith.constant 0 : index
    %54 = vector.load %arg9[%c37, %c0_25] : memref<184x24xf32, #tpu.memory_space<vmem>>, vector<144x24xf32>
    %55 = vector.broadcast %25 : vector<1x24xf32> to vector<144x24xf32>
    %56 = arith.mulf %54, %55 : vector<144x24xf32>
    %57 = arith.addf %53, %56 : vector<144x24xf32>
    %c38 = arith.constant 38 : index
    %c0_26 = arith.constant 0 : index
    %58 = vector.load %arg9[%c38, %c0_26] : memref<184x24xf32, #tpu.memory_space<vmem>>, vector<144x24xf32>
    %59 = vector.broadcast %26 : vector<1x24xf32> to vector<144x24xf32>
    %60 = arith.mulf %58, %59 : vector<144x24xf32>
    %61 = arith.addf %57, %60 : vector<144x24xf32>
    %62 = vector.broadcast %15 : vector<1x24xf32> to vector<144x24xf32>
    %63 = arith.addf %61, %62 : vector<144x24xf32>
    %cst_27 = arith.constant 0.000000e+00 : f32
    %cst_28 = arith.constant 6.000000e+00 : f32
    %64 = vector.broadcast %cst_27 : f32 to vector<144x24xf32>
    %65 = arith.maximumf %64, %63 : vector<144x24xf32>
    %66 = vector.broadcast %cst_28 : f32 to vector<144x24xf32>
    %67 = arith.minimumf %66, %65 : vector<144x24xf32>
    %cst_29 = arith.constant dense<0.000000e+00> : vector<144x4xf32>
    %68 = tpu.matmul %67, %16, %cst_29 {dimension_numbers = #tpu.dot_dimension_numbers<[1], [0], [0], [1], [0, 0, 1, 1], [], []>} : vector<144x24xf32>, vector<24x4xf32>, vector<144x4xf32> -> vector<144x4xf32>
    %69 = vector.broadcast %17 : vector<1x4xf32> to vector<144x4xf32>
    %70 = arith.addf %68, %69 : vector<144x4xf32>
    %c18_i32 = arith.constant 18 : i32
    %71 = arith.addi %1, %c18_i32 : i32
    %c1_i32 = arith.constant 1 : i32
    %72 = arith.addi %71, %c1_i32 : i32
    %c0_30 = arith.constant 0 : index
    %73 = arith.index_cast %72 : i32 to index
    %c0_31 = arith.constant 0 : index
    %74 = vector.load %arg2[%c0_30, %73, %c0_31] : memref<1x324x5xf32, #tpu.memory_space<vmem>>, vector<1x144x5xf32>
    %75 = vector.shape_cast %74 : vector<1x144x5xf32> to vector<144x5xf32>
    %76 = vector.extract_strided_slice %75 {offsets = [0, 0], sizes = [144, 4], strides = [1, 1]} : vector<144x5xf32> to vector<144x4xf32>
    %77 = arith.addf %70, %76 : vector<144x4xf32>
    %c0_32 = arith.constant 0 : index
    %c0_33 = arith.constant 0 : index
    %c0_34 = arith.constant 0 : index
    %c0_35 = arith.constant 0 : index
    %78 = vector.load %arg8[%c0_32, %c0_33, %c0_34, %c0_35] : memref<1x1x144x4xf32, #tpu.memory_space<vmem>>, vector<1x1x144x4xf32>
    %79 = vector.shape_cast %78 : vector<1x1x144x4xf32> to vector<144x4xf32>
    %80 = vector.shape_cast %77 : vector<144x4xf32> to vector<1x1x144x4xf32>
    tpu.vector_store %arg8[%c0_32, %c0_33, %c0_34, %c0_35], %80 {strides = array<i32>} : memref<1x1x144x4xf32, #tpu.memory_space<vmem>>, vector<1x1x144x4xf32>,
    return
  }
  func.func @transform_0(%arg0: i32, %arg1: i32) -> (i32, i32, i32) {
    %c0_i32 = arith.constant 0 : i32
    %c0_i32_0 = arith.constant 0 : i32
    %c0_i32_1 = arith.constant 0 : i32
    return %arg0, %c0_i32, %c0_i32_0 : i32, i32, i32
  }
  func.func @transform_1(%arg0: i32, %arg1: i32) -> (i32, i32) {
    %c0_i32 = arith.constant 0 : i32
    %c0_i32_0 = arith.constant 0 : i32
    %c0_i32_1 = arith.constant 0 : i32
    return %c0_i32, %c0_i32_0 : i32, i32
  }
  func.func @transform_2(%arg0: i32, %arg1: i32) -> (i32, i32) {
    %c0_i32 = arith.constant 0 : i32
    %c0_i32_0 = arith.constant 0 : i32
    %c0_i32_1 = arith.constant 0 : i32
    return %c0_i32, %c0_i32_0 : i32, i32
  }
  func.func @transform_3(%arg0: i32, %arg1: i32) -> (i32, i32) {
    %c0_i32 = arith.constant 0 : i32
    %c0_i32_0 = arith.constant 0 : i32
    %c0_i32_1 = arith.constant 0 : i32
    return %c0_i32, %c0_i32_0 : i32, i32
  }
  func.func @transform_4(%arg0: i32, %arg1: i32) -> (i32, i32) {
    %c0_i32 = arith.constant 0 : i32
    %c0_i32_0 = arith.constant 0 : i32
    %c0_i32_1 = arith.constant 0 : i32
    return %c0_i32, %c0_i32_0 : i32, i32
  }
  func.func @transform_5(%arg0: i32, %arg1: i32) -> (i32, i32) {
    %c0_i32 = arith.constant 0 : i32
    %c0_i32_0 = arith.constant 0 : i32
    %c0_i32_1 = arith.constant 0 : i32
    return %c0_i32, %c0_i32_0 : i32, i32
  }
  func.func @transform_6(%arg0: i32, %arg1: i32) -> (i32, i32, i32, i32) {
    %c0_i32 = arith.constant 0 : i32
    %c0_i32_0 = arith.constant 0 : i32
    %c0_i32_1 = arith.constant 0 : i32
    return %arg0, %arg1, %c0_i32, %c0_i32_0 : i32, i32, i32, i32
  }
}

</mosaic_0001>

<llo_original>
// kernel: tpu_custom_call.1
$region0: #{tpu_custom_call.1}
  #allocation0 [shape = 'u32[]', space=smem, size = 0x4, offset = 0x4, fixed_abs, tag = 'smem constant byte address 0x4 - core index']
  #allocation1 [shape = 'u32[72,128]{1,0:T(1,128)}', space=vmem, size = 0x9000, scoped, tag = 'internal scratch']
  #allocation2 [shape = 'f32[184,24]{1,0:T(8,128)}', space=vmem, size = 0x17000, scoped, tag = 'scratch operand']
  %s0 = inlined_call_operand.vmem [shape: f32[2,324,5], index: 0, kind: input, shape index: {}]
  %s1 = inlined_call_operand.vmem [shape: f32[5,24], index: 1, kind: input, shape index: {}]
  %s2 = inlined_call_operand.vmem [shape: f32[9,24], index: 2, kind: input, shape index: {}]
  %s3 = inlined_call_operand.vmem [shape: f32[1,24], index: 3, kind: input, shape index: {}]
  %s4 = inlined_call_operand.vmem [shape: f32[24,4], index: 4, kind: input, shape index: {}]
  %s5 = inlined_call_operand.vmem [shape: f32[1,4], index: 5, kind: input, shape index: {}]
  %s6 = inlined_call_operand.vmem [shape: f32[2,2,144,4], index: 6, kind: output, shape index: {}]
  %s7 = sld [smem:[#allocation0]]
  $region57: #{tpu_custom_call.1} parent=0
    _
  %s9 = ssub.s32 1, %s7
  %s10 = scalar_select 0, %s9, %s7
  loop: start=0, step=1, limit=6
  $region2: #{tpu_custom_call.1} parent=0 // loop_pre_header
    _
  $region3: #{tpu_custom_call.1} parent=0 // loop_header
    %s12 = sphi 0, %s16
    %p13 = scmp.ge.s32.totalorder %s12, 6
    %s19 = sphi 0, %s31
    %s20 = sphi 0, %s27
    %s21 = sphi 0, %s19
    %s22 = sphi 0, %s20
    %s23 = sphi 0, %s21
    %s24 = sphi 0, %s22
    %s34 = sphi 0, %s36
    %s37 = sphi 0, %s34
    %s38 = sphi 0, %s37
    %s54 = sphi 0, %s38
    %s58 = sphi 0, %s58
    %s60 = sphi 0, %s58
    %s61 = sphi 0, %s60
    %s75 = sphi 0, %s61
    %s79 = sphi 0, %s79
    %s81 = sphi 0, %s79
    %s82 = sphi 0, %s81
    %s96 = sphi 0, %s82
    %s100 = sphi 0, %s100
    %s102 = sphi 0, %s100
    %s103 = sphi 0, %s102
    %s117 = sphi 0, %s103
    %s121 = sphi 0, %s121
    %s123 = sphi 0, %s121
    %s124 = sphi 0, %s123
    %s138 = sphi 0, %s124
    %s142 = sphi 0, %s142
    %s144 = sphi 0, %s142
    %s145 = sphi 0, %s144
    %s159 = sphi 0, %s145
    %s167 = sphi 0, %s169
    %s170 = sphi 0, %s167
    %s171 = sphi 0, %s170
    %s187 = sphi 0, %s171
  $region4: #{tpu_custom_call.1} parent=0 // loop_header_branch
    %15 = sbr.rel (%p13) target = $region8
  $region5: #{tpu_custom_call.1} parent=0 // loop_body
    %s17 = ssub.s32 %s12, 1
    %s18 = ssub.s32 %s12, 2
    %s25 = sadd.s32 1, %s20
    %p26 = scmp.ge.s32.totalorder %s25, 2
    %s27 = scalar_select %p26, 0, %s25
    %s28 = sadd.s32 1, %s19
    %s29 = scalar_select %p26, %s28, %s19
    %p30 = scmp.ge.s32.totalorder %s29, 2
    %s31 = scalar_select %p30, 0, %s29
    %s32 = ssub.s32 %s19, %s31
    %p33 = scmp.eq.s32.totalorder %s32, 0
    %s35 = sadd.s32 %s34, 1
    %s36 = scalar_select %p33, %s34, %s35
    %p39 = pneg %p33
    %p40 = scmp.eq.s32.totalorder %s12, 3
    %p41 = por %p39, %p40
    %p42 = scmp.ne.s32.totalorder %s34, %s37
    %p43 = scmp.eq.s32.totalorder %s12, 0
    %p44 = por %p42, %p43
    %p45 = scmp.ne.s32.totalorder %s34, %s37
    %p46 = scmp.eq.s32.totalorder %s17, 3
    %p47 = por %p45, %p46
    %p48 = scmp.ne.s32.totalorder %s37, %s38
    %p49 = scmp.eq.s32.totalorder %s17, 0
    %p50 = por %p48, %p49
    %p51 = scmp.ne.s32.totalorder %s37, %s38
    %p52 = scmp.eq.s32.totalorder %s18, 3
    %p53 = por %p51, %p52
    %p55 = scmp.ne.s32.totalorder %s38, %s54
    %p56 = scmp.eq.s32.totalorder %s18, 0
    %p57 = por %p55, %p56
    %s59 = sadd.s32 %s58, 1
    %p62 = scmp.eq.s32.totalorder %s12, 3
    %p63 = scmp.ne.s32.totalorder %s58, %s60
    %p64 = scmp.eq.s32.totalorder %s12, 0
    %p65 = por %p63, %p64
    %p66 = scmp.ne.s32.totalorder %s58, %s60
    %p67 = scmp.eq.s32.totalorder %s17, 3
    %p68 = por %p66, %p67
    %p69 = scmp.ne.s32.totalorder %s60, %s61
    %p70 = scmp.eq.s32.totalorder %s17, 0
    %p71 = por %p69, %p70
    %p72 = scmp.ne.s32.totalorder %s60, %s61
    %p73 = scmp.eq.s32.totalorder %s18, 3
    %p74 = por %p72, %p73
    %p76 = scmp.ne.s32.totalorder %s61, %s75
    %p77 = scmp.eq.s32.totalorder %s18, 0
    %p78 = por %p76, %p77
    %s80 = sadd.s32 %s79, 1
    %p83 = scmp.eq.s32.totalorder %s12, 3
    %p84 = scmp.ne.s32.totalorder %s79, %s81
    %p85 = scmp.eq.s32.totalorder %s12, 0
    %p86 = por %p84, %p85
    %p87 = scmp.ne.s32.totalorder %s79, %s81
    %p88 = scmp.eq.s32.totalorder %s17, 3
    %p89 = por %p87, %p88
    %p90 = scmp.ne.s32.totalorder %s81, %s82
    %p91 = scmp.eq.s32.totalorder %s17, 0
    %p92 = por %p90, %p91
    %p93 = scmp.ne.s32.totalorder %s81, %s82
    %p94 = scmp.eq.s32.totalorder %s18, 3
    %p95 = por %p93, %p94
    %p97 = scmp.ne.s32.totalorder %s82, %s96
    %p98 = scmp.eq.s32.totalorder %s18, 0
    %p99 = por %p97, %p98
    %s101 = sadd.s32 %s100, 1
    %p104 = scmp.eq.s32.totalorder %s12, 3
    %p105 = scmp.ne.s32.totalorder %s100, %s102
    %p106 = scmp.eq.s32.totalorder %s12, 0
    %p107 = por %p105, %p106
    %p108 = scmp.ne.s32.totalorder %s100, %s102
    %p109 = scmp.eq.s32.totalorder %s17, 3
    %p110 = por %p108, %p109
    %p111 = scmp.ne.s32.totalorder %s102, %s103
    %p112 = scmp.eq.s32.totalorder %s17, 0
    %p113 = por %p111, %p112
    %p114 = scmp.ne.s32.totalorder %s102, %s103
    %p115 = scmp.eq.s32.totalorder %s18, 3
    %p116 = por %p114, %p115
    %p118 = scmp.ne.s32.totalorder %s103, %s117
    %p119 = scmp.eq.s32.totalorder %s18, 0
    %p120 = por %p118, %p119
    %s122 = sadd.s32 %s121, 1
    %p125 = scmp.eq.s32.totalorder %s12, 3
    %p126 = scmp.ne.s32.totalorder %s121, %s123
    %p127 = scmp.eq.s32.totalorder %s12, 0
    %p128 = por %p126, %p127
    %p129 = scmp.ne.s32.totalorder %s121, %s123
    %p130 = scmp.eq.s32.totalorder %s17, 3
    %p131 = por %p129, %p130
    %p132 = scmp.ne.s32.totalorder %s123, %s124
    %p133 = scmp.eq.s32.totalorder %s17, 0
    %p134 = por %p132, %p133
    %p135 = scmp.ne.s32.totalorder %s123, %s124
    %p136 = scmp.eq.s32.totalorder %s18, 3
    %p137 = por %p135, %p136
    %p139 = scmp.ne.s32.totalorder %s124, %s138
    %p140 = scmp.eq.s32.totalorder %s18, 0
    %p141 = por %p139, %p140
    %s143 = sadd.s32 %s142, 1
    %p146 = scmp.eq.s32.totalorder %s12, 3
    %p147 = scmp.ne.s32.totalorder %s142, %s144
    %p148 = scmp.eq.s32.totalorder %s12, 0
    %p149 = por %p147, %p148
    %p150 = scmp.ne.s32.totalorder %s142, %s144
    %p151 = scmp.eq.s32.totalorder %s17, 3
    %p152 = por %p150, %p151
    %p153 = scmp.ne.s32.totalorder %s144, %s145
    %p154 = scmp.eq.s32.totalorder %s17, 0
    %p155 = por %p153, %p154
    %p156 = scmp.ne.s32.totalorder %s144, %s145
    %p157 = scmp.eq.s32.totalorder %s18, 3
    %p158 = por %p156, %p157
    %p160 = scmp.ne.s32.totalorder %s145, %s159
    %p161 = scmp.eq.s32.totalorder %s18, 0
    %p162 = por %p160, %p161
    %s163 = ssub.s32 %s19, %s31
    %s164 = ssub.s32 %s20, %s27
    %s165 = sor.u32 %s163, %s164
    %p166 = scmp.eq.s32.totalorder %s165, 0
    %s168 = sadd.s32 %s167, 1
    %s169 = scalar_select %p166, %s167, %s168
    %p172 = pneg %p166
    %p173 = scmp.eq.s32.totalorder %s12, 3
    %p174 = por %p172, %p173
    %p175 = scmp.ne.s32.totalorder %s167, %s170
    %p176 = scmp.eq.s32.totalorder %s12, 0
    %p177 = por %p175, %p176
    %p178 = scmp.ne.s32.totalorder %s167, %s170
    %p179 = scmp.eq.s32.totalorder %s17, 3
    %p180 = por %p178, %p179
    %p181 = scmp.ne.s32.totalorder %s170, %s171
    %p182 = scmp.eq.s32.totalorder %s17, 0
    %p183 = por %p181, %p182
    %p184 = scmp.ne.s32.totalorder %s170, %s171
    %p185 = scmp.eq.s32.totalorder %s18, 3
    %p186 = por %p184, %p185
    %p188 = scmp.ne.s32.totalorder %s171, %s187
    %p189 = scmp.eq.s32.totalorder %s18, 0
    %p190 = por %p188, %p189
    %p191 = scmp.le.s32.totalorder 1, %s12
    %p192 = scmp.lt.s32.totalorder %s12, 5
    %p193 = pnand %p191, %p192
    %p194 = pneg %p193
    // Predicated region
    $region9: #{tpu_custom_call.1} parent=5 // pred_check
      _
    $region10: #{tpu_custom_call.1} parent=5 // pred_check_branch
      %196 = sbr.rel (%p193) target = $region12
    $region11: #{tpu_custom_call.1} parent=5 // pred_region
      %s197 = ssub.s32 %s12, 1
      // Predicated region
      $region13: #{tpu_custom_call.1} parent=11 // pred_check
        %p198 = pneg %p71
      $region14: #{tpu_custom_call.1} parent=11 // pred_check_branch
        %200 = sbr.rel (%p198) target = $region16
      $region15: #{tpu_custom_call.1} parent=11 // pred_region
        _
      $region16: #{tpu_custom_call.1} parent=11 // pred_fallthru
        _
      // Predicated region
      $region17: #{tpu_custom_call.1} parent=11 // pred_check
        %p201 = pneg %p92
      $region18: #{tpu_custom_call.1} parent=11 // pred_check_branch
        %203 = sbr.rel (%p201) target = $region20
      $region19: #{tpu_custom_call.1} parent=11 // pred_region
        _
      $region20: #{tpu_custom_call.1} parent=11 // pred_fallthru
        _
      // Predicated region
      $region21: #{tpu_custom_call.1} parent=11 // pred_check
        %p204 = pneg %p113
      $region22: #{tpu_custom_call.1} parent=11 // pred_check_branch
        %206 = sbr.rel (%p204) target = $region24
      $region23: #{tpu_custom_call.1} parent=11 // pred_region
        _
      $region24: #{tpu_custom_call.1} parent=11 // pred_fallthru
        _
      // Predicated region
      $region25: #{tpu_custom_call.1} parent=11 // pred_check
        %p207 = pneg %p134
      $region26: #{tpu_custom_call.1} parent=11 // pred_check_branch
        %209 = sbr.rel (%p207) target = $region28
      $region27: #{tpu_custom_call.1} parent=11 // pred_region
        _
      $region28: #{tpu_custom_call.1} parent=11 // pred_fallthru
        _
      // Predicated region
      $region29: #{tpu_custom_call.1} parent=11 // pred_check
        %p210 = pneg %p155
      $region30: #{tpu_custom_call.1} parent=11 // pred_check_branch
        %212 = sbr.rel (%p210) target = $region32
      $region31: #{tpu_custom_call.1} parent=11 // pred_region
        _
      $region32: #{tpu_custom_call.1} parent=11 // pred_fallthru
        _
    $region12: #{tpu_custom_call.1} parent=5 // pred_fallthru
      _
    %p213 = scmp.lt.s32.totalorder %s12, 4
    // Predicated region
    $region33: #{tpu_custom_call.1} parent=5 // pred_check
      %p214 = pneg %p213
    $region34: #{tpu_custom_call.1} parent=5 // pred_check_branch
      %216 = sbr.rel (%p214) target = $region36
    $region35: #{tpu_custom_call.1} parent=5 // pred_region
      // Predicated region
      $region37: #{tpu_custom_call.1} parent=35 // pred_check
        %p217 = pneg %p44
      $region38: #{tpu_custom_call.1} parent=35 // pred_check_branch
        %219 = sbr.rel (%p217) target = $region40
      $region39: #{tpu_custom_call.1} parent=35 // pred_region
        %p220 = scmp.lt.s32.totalorder %s19, 1
        %s221 = scalar_select %p220, %s19, 1
        %s222 = smul.addr %s221, 41
        %s223 = smul.addr %s222, 8
        %s224 = scalar_lea.vmem %s0, %s223
      $region40: #{tpu_custom_call.1} parent=35 // pred_fallthru
        _
    $region36: #{tpu_custom_call.1} parent=5 // pred_fallthru
      _
    %p225 = scmp.le.s32.totalorder 1, %s12
    %p226 = scmp.lt.s32.totalorder %s12, 5
    %p227 = pnand %p225, %p226
    %p228 = pneg %p227
    // Predicated region
    $region41: #{tpu_custom_call.1} parent=5 // pred_check
      _
    $region42: #{tpu_custom_call.1} parent=5 // pred_check_branch
      %230 = sbr.rel (%p227) target = $region44
    $region43: #{tpu_custom_call.1} parent=5 // pred_region
      %s231 = ssub.s32 %s12, 1
      %p232 = scmp.lt.s32.totalorder %s21, 1
      %s233 = scalar_select %p232, %s21, 1
      %s234 = smul.addr %s233, 41
      %s235 = smul.addr %s234, 8
      %s236 = scalar_lea.vmem %s0, %s235
      %p237 = pneg %p50
      %p238 = pneg %p47
      %p239 = pneg %p71
      %p240 = pneg %p68
      %p241 = pneg %p92
      %p242 = pneg %p89
      %p243 = pneg %p113
      %p244 = pneg %p110
      %p245 = pneg %p134
      %p246 = pneg %p131
      %p247 = pneg %p155
      %p248 = pneg %p152
      %p249 = pneg %p183
      %p250 = pneg %p180
      %p251 = scmp.lt.s32.totalorder %s21, 1
      %s252 = scalar_select %p251, %s21, 1
      %p253 = scmp.lt.s32.totalorder %s22, 1
      %s254 = scalar_select %p253, %s22, 1
      %s255 = smul.addr %s254, 18
      %s256 = smul.addr %s252, 36
      %s257 = sadd.s32 %s255, %s256
      %s258 = smul.addr %s257, 8
      %s259 = scalar_lea.vmem %s6, %s258
      %p260 = scmp.lt.s32.totalorder %s21, 1
      %s261 = scalar_select %p260, %s21, 1
      %s262 = smul.addr %s261, 41
      %s263 = smul.addr %s262, 8
      %s264 = scalar_lea.vmem %s0, %s263
      %p265 = scmp.lt.s32.totalorder %s21, 1
      %s266 = scalar_select %p265, %s21, 1
      %p267 = scmp.lt.s32.totalorder %s22, 1
      %s268 = scalar_select %p267, %s22, 1
      %s269 = smul.addr %s268, 18
      %s270 = smul.addr %s266, 36
      %s271 = sadd.s32 %s269, %s270
      %s272 = smul.addr %s271, 8
      %s273 = scalar_lea.vmem %s6, %s272
      %s274 = smul.u32 %s22, 144
      %s275 = scalar_lea.vmem %s264, %s274
      %v276 = vld [vmem:[%s275] sm:$0xff]
      %v277 = vld [vmem:[%s275 + $0x8] sm:$0xff]
      %v278 = vld [vmem:[%s275 + $0x10] sm:$0xff]
      %v279 = vld [vmem:[%s275 + $0x18] sm:$0xff]
      %v280 = vld [vmem:[%s275 + $0x20] sm:$0xff]
      %v281 = vld [vmem:[%s275 + $0x28] sm:$0xff]
      %v282 = vld [vmem:[%s275 + $0x30] sm:$0xff]
      %v283 = vld [vmem:[%s275 + $0x38] sm:$0xff]
      %v284 = vld [vmem:[%s275 + $0x40] sm:$0xff]
      %v285 = vld [vmem:[%s275 + $0x48] sm:$0xff]
      %v286 = vld [vmem:[%s275 + $0x50] sm:$0xff]
      %v287 = vld [vmem:[%s275 + $0x58] sm:$0xff]
      %v288 = vld [vmem:[%s275 + $0x60] sm:$0xff]
      %v289 = vld [vmem:[%s275 + $0x68] sm:$0xff]
      %v290 = vld [vmem:[%s275 + $0x70] sm:$0xff]
      %v291 = vld [vmem:[%s275 + $0x78] sm:$0xff]
      %v292 = vld [vmem:[%s275 + $0x80] sm:$0xff]
      %v293 = vld [vmem:[%s275 + $0x88] sm:$0xff]
      %v294 = vld [vmem:[%s275 + $0x90] sm:$0xff]
      %v295 = vld [vmem:[%s275 + $0x98] sm:$0xff]
      %v296 = vld [vmem:[%s275 + $0xa0] sm:$0xff]
      %v297 = vld [vmem:[%s275 + $0xa8] sm:$0xff]
      %v298 = vld [vmem:[%s275 + $0xb0] sm:$0xf]
      %v299 = vld [vmem:[%s1] sm:$0x1f]
      %vm300 = vcmask 39936
      %v302 = vsel %vm300, %v276, 0
      %v305 = vsel %vm300, %v277, 0
      %v308 = vsel %vm300, %v278, 0
      %v311 = vsel %vm300, %v279, 0
      %v314 = vsel %vm300, %v280, 0
      %v317 = vsel %vm300, %v281, 0
      %v320 = vsel %vm300, %v282, 0
      %v323 = vsel %vm300, %v283, 0
      %v326 = vsel %vm300, %v284, 0
      %v329 = vsel %vm300, %v285, 0
      %v332 = vsel %vm300, %v286, 0
      %v335 = vsel %vm300, %v287, 0
      %v338 = vsel %vm300, %v288, 0
      %v341 = vsel %vm300, %v289, 0
      %v344 = vsel %vm300, %v290, 0
      %v347 = vsel %vm300, %v291, 0
      %v350 = vsel %vm300, %v292, 0
      %v353 = vsel %vm300, %v293, 0
      %v356 = vsel %vm300, %v294, 0
      %v359 = vsel %vm300, %v295, 0
      %v362 = vsel %vm300, %v296, 0
      %v365 = vsel %vm300, %v297, 0
      %v368 = vsel %vm300, %v298, 0
      %vm370 = vcmask 1044480
      %v372 = vsel %vm370, %v299, 0
      %374 = vmatpush.msra.mxu0 0.0
      %375 = vmatpush.msra.mxu0 0.0
      %376 = vmatpush.msra.mxu0 0.0
      %377 = vmatpush.msra.mxu0 0.0
      %378 = vmatpush.msra.mxu0 0.0
      %379 = vmatpush.msra.mxu0 0.0
      %380 = vmatpush.msra.mxu0 0.0
      %381 = vmatpush.msra.mxu0 0.0
      %382 = vmatpush.msra.mxu0 0.0
      %383 = vmatpush.msra.mxu0 0.0
      %384 = vmatpush.msra.mxu0 0.0
      %385 = vmatpush.msra.mxu0 0.0
      %386 = vmatpush.msra.mxu0 0.0
      %387 = vmatpush.msra.mxu0 0.0
      %388 = vmatpush.msra.mxu0 0.0
      %389 = vmatpush.msra.mxu0 %v372
      %390 = vmatmul.f32.gmra.mxu0 %v302
      %v391 = vpop.f32.mrf.mxu0
      %v392 = vadd.f32 0.0, %v391
      %393 = vmatmul.f32.gmra.mxu0 %v305
      %v394 = vpop.f32.mrf.mxu0
      %v395 = vadd.f32 0.0, %v394
      %396 = vmatmul.f32.gmra.mxu0 %v308
      %v397 = vpop.f32.mrf.mxu0
      %v398 = vadd.f32 0.0, %v397
      %399 = vmatmul.f32.gmra.mxu0 %v311
      %v400 = vpop.f32.mrf.mxu0
      %v401 = vadd.f32 0.0, %v400
      %402 = vmatmul.f32.gmra.mxu0 %v314
      %v403 = vpop.f32.mrf.mxu0
      %v404 = vadd.f32 0.0, %v403
      %405 = vmatmul.f32.gmra.mxu0 %v317
      %v406 = vpop.f32.mrf.mxu0
      %v407 = vadd.f32 0.0, %v406
      %408 = vmatmul.f32.gmra.mxu0 %v320
      %v409 = vpop.f32.mrf.mxu0
      %v410 = vadd.f32 0.0, %v409
      %411 = vmatmul.f32.gmra.mxu0 %v323
      %v412 = vpop.f32.mrf.mxu0
      %v413 = vadd.f32 0.0, %v412
      %414 = vmatmul.f32.gmra.mxu0 %v326
      %v415 = vpop.f32.mrf.mxu0
      %v416 = vadd.f32 0.0, %v415
      %417 = vmatmul.f32.gmra.mxu0 %v329
      %v418 = vpop.f32.mrf.mxu0
      %v419 = vadd.f32 0.0, %v418
      %420 = vmatmul.f32.gmra.mxu0 %v332
      %v421 = vpop.f32.mrf.mxu0
      %v422 = vadd.f32 0.0, %v421
      %423 = vmatmul.f32.gmra.mxu0 %v335
      %v424 = vpop.f32.mrf.mxu0
      %v425 = vadd.f32 0.0, %v424
      %426 = vmatmul.f32.gmra.mxu0 %v338
      %v427 = vpop.f32.mrf.mxu0
      %v428 = vadd.f32 0.0, %v427
      %429 = vmatmul.f32.gmra.mxu0 %v341
      %v430 = vpop.f32.mrf.mxu0
      %v431 = vadd.f32 0.0, %v430
      %432 = vmatmul.f32.gmra.mxu0 %v344
      %v433 = vpop.f32.mrf.mxu0
      %v434 = vadd.f32 0.0, %v433
      %435 = vmatmul.f32.gmra.mxu0 %v347
      %v436 = vpop.f32.mrf.mxu0
      %v437 = vadd.f32 0.0, %v436
      %438 = vmatmul.f32.gmra.mxu0 %v350
      %v439 = vpop.f32.mrf.mxu0
      %v440 = vadd.f32 0.0, %v439
      %441 = vmatmul.f32.gmra.mxu0 %v353
      %v442 = vpop.f32.mrf.mxu0
      %v443 = vadd.f32 0.0, %v442
      %444 = vmatmul.f32.gmra.mxu0 %v356
      %v445 = vpop.f32.mrf.mxu0
      %v446 = vadd.f32 0.0, %v445
      %447 = vmatmul.f32.gmra.mxu0 %v359
      %v448 = vpop.f32.mrf.mxu0
      %v449 = vadd.f32 0.0, %v448
      %450 = vmatmul.f32.gmra.mxu0 %v362
      %v451 = vpop.f32.mrf.mxu0
      %v452 = vadd.f32 0.0, %v451
      %453 = vmatmul.f32.gmra.mxu0 %v365
      %v454 = vpop.f32.mrf.mxu0
      %v455 = vadd.f32 0.0, %v454
      %456 = vmatmul.f32.gmra.mxu0 %v368
      %v457 = vpop.f32.mrf.mxu0
      %v458 = vadd.f32 0.0, %v457
      %459 = vdwg.mxu0
      %v460 = vmax.f32 %v392, 0.0
      %v461 = vmax.f32 %v395, 0.0
      %v462 = vmax.f32 %v398, 0.0
      %v463 = vmax.f32 %v401, 0.0
      %v464 = vmax.f32 %v404, 0.0
      %v465 = vmax.f32 %v407, 0.0
      %v466 = vmax.f32 %v410, 0.0
      %v467 = vmax.f32 %v413, 0.0
      %v468 = vmax.f32 %v416, 0.0
      %v469 = vmax.f32 %v419, 0.0
      %v470 = vmax.f32 %v422, 0.0
      %v471 = vmax.f32 %v425, 0.0
      %v472 = vmax.f32 %v428, 0.0
      %v473 = vmax.f32 %v431, 0.0
      %v474 = vmax.f32 %v434, 0.0
      %v475 = vmax.f32 %v437, 0.0
      %v476 = vmax.f32 %v440, 0.0
      %v477 = vmax.f32 %v443, 0.0
      %v478 = vmax.f32 %v446, 0.0
      %v479 = vmax.f32 %v449, 0.0
      %v480 = vmax.f32 %v452, 0.0
      %v481 = vmax.f32 %v455, 0.0
      %v482 = vmax.f32 %v458, 0.0
      %v483 = vmin.f32 %v460, 6.0
      %v484 = vmin.f32 %v461, 6.0
      %v485 = vmin.f32 %v462, 6.0
      %v486 = vmin.f32 %v463, 6.0
      %v487 = vmin.f32 %v464, 6.0
      %v488 = vmin.f32 %v465, 6.0
      %v489 = vmin.f32 %v466, 6.0
      %v490 = vmin.f32 %v467, 6.0
      %v491 = vmin.f32 %v468, 6.0
      %v492 = vmin.f32 %v469, 6.0
      %v493 = vmin.f32 %v470, 6.0
      %v494 = vmin.f32 %v471, 6.0
      %v495 = vmin.f32 %v472, 6.0
      %v496 = vmin.f32 %v473, 6.0
      %v497 = vmin.f32 %v474, 6.0
      %v498 = vmin.f32 %v475, 6.0
      %v499 = vmin.f32 %v476, 6.0
      %v500 = vmin.f32 %v477, 6.0
      %v501 = vmin.f32 %v478, 6.0
      %v502 = vmin.f32 %v479, 6.0
      %v503 = vmin.f32 %v480, 6.0
      %v504 = vmin.f32 %v481, 6.0
      %v505 = vmin.f32 %v482, 6.0
      %vm506 = vcmask 195584
      %507 = vst.msk [vmem:[#allocation2] sm:$0xff] %vm506, %v483
      %508 = vst.msk [vmem:[#allocation2 + $0x8] sm:$0xff] %vm506, %v484
      %509 = vst.msk [vmem:[#allocation2 + $0x10] sm:$0xff] %vm506, %v485
      %510 = vst.msk [vmem:[#allocation2 + $0x18] sm:$0xff] %vm506, %v486
      %511 = vst.msk [vmem:[#allocation2 + $0x20] sm:$0xff] %vm506, %v487
      %512 = vst.msk [vmem:[#allocation2 + $0x28] sm:$0xff] %vm506, %v488
      %513 = vst.msk [vmem:[#allocation2 + $0x30] sm:$0xff] %vm506, %v489
      %514 = vst.msk [vmem:[#allocation2 + $0x38] sm:$0xff] %vm506, %v490
      %515 = vst.msk [vmem:[#allocation2 + $0x40] sm:$0xff] %vm506, %v491
      %516 = vst.msk [vmem:[#allocation2 + $0x48] sm:$0xff] %vm506, %v492
      %517 = vst.msk [vmem:[#allocation2 + $0x50] sm:$0xff] %vm506, %v493
      %518 = vst.msk [vmem:[#allocation2 + $0x58] sm:$0xff] %vm506, %v494
      %519 = vst.msk [vmem:[#allocation2 + $0x60] sm:$0xff] %vm506, %v495
      %520 = vst.msk [vmem:[#allocation2 + $0x68] sm:$0xff] %vm506, %v496
      %521 = vst.msk [vmem:[#allocation2 + $0x70] sm:$0xff] %vm506, %v497
      %522 = vst.msk [vmem:[#allocation2 + $0x78] sm:$0xff] %vm506, %v498
      %523 = vst.msk [vmem:[#allocation2 + $0x80] sm:$0xff] %vm506, %v499
      %524 = vst.msk [vmem:[#allocation2 + $0x88] sm:$0xff] %vm506, %v500
      %525 = vst.msk [vmem:[#allocation2 + $0x90] sm:$0xff] %vm506, %v501
      %526 = vst.msk [vmem:[#allocation2 + $0x98] sm:$0xff] %vm506, %v502
      %527 = vst.msk [vmem:[#allocation2 + $0xa0] sm:$0xff] %vm506, %v503
      %528 = vst.msk [vmem:[#allocation2 + $0xa8] sm:$0xff] %vm506, %v504
      %vm529 = vcmask 191488
      %530 = vst.msk [vmem:[#allocation2 + $0xb0] sm:$0xf] %vm529, %v505
      %531 = vst.msk [vmem:[#allocation2 + $0xb4] sm:$0xf] %vm529, 0.0
      %v532 = vld [vmem:[%s2] sm:$0xff]
      %v533 = vld [vmem:[%s2 + $0x8] sm:$0x1]
      %v534 = vld [vmem:[%s3] sm:$0x1]
      %v535 = vld [vmem:[%s4] sm:$0xff]
      %v536 = vld [vmem:[%s4 + $0x8] sm:$0xff]
      %v537 = vld [vmem:[%s4 + $0x10] sm:$0xff]
      %v538 = vld [vmem:[%s5] sm:$0x1]
      %v539 = vld [vmem:[#allocation2] sm:$0xff]
      %v540 = vld [vmem:[#allocation2 + $0x8] sm:$0xff]
      %v541 = vld [vmem:[#allocation2 + $0x10] sm:$0xff]
      %v542 = vld [vmem:[#allocation2 + $0x18] sm:$0xff]
      %v543 = vld [vmem:[#allocation2 + $0x20] sm:$0xff]
      %v544 = vld [vmem:[#allocation2 + $0x28] sm:$0xff]
      %v545 = vld [vmem:[#allocation2 + $0x30] sm:$0xff]
      %v546 = vld [vmem:[#allocation2 + $0x38] sm:$0xff]
      %v547 = vld [vmem:[#allocation2 + $0x40] sm:$0xff]
      %v548 = vld [vmem:[#allocation2 + $0x48] sm:$0xff]
      %v549 = vld [vmem:[#allocation2 + $0x50] sm:$0xff]
      %v550 = vld [vmem:[#allocation2 + $0x58] sm:$0xff]
      %v551 = vld [vmem:[#allocation2 + $0x60] sm:$0xff]
      %v552 = vld [vmem:[#allocation2 + $0x68] sm:$0xff]
      %v553 = vld [vmem:[#allocation2 + $0x70] sm:$0xff]
      %v554 = vld [vmem:[#allocation2 + $0x78] sm:$0xff]
      %v555 = vld [vmem:[#allocation2 + $0x80] sm:$0xff]
      %v556 = vld [vmem:[#allocation2 + $0x88] sm:$0xff]
      %v557 = vperm.slane %v532, 0
      %v558 = vmul.f32 %v539, %v557
      %v559 = vmul.f32 %v540, %v557
      %v560 = vmul.f32 %v541, %v557
      %v561 = vmul.f32 %v542, %v557
      %v562 = vmul.f32 %v543, %v557
      %v563 = vmul.f32 %v544, %v557
      %v564 = vmul.f32 %v545, %v557
      %v565 = vmul.f32 %v546, %v557
      %v566 = vmul.f32 %v547, %v557
      %v567 = vmul.f32 %v548, %v557
      %v568 = vmul.f32 %v549, %v557
      %v569 = vmul.f32 %v550, %v557
      %v570 = vmul.f32 %v551, %v557
      %v571 = vmul.f32 %v552, %v557
      %v572 = vmul.f32 %v553, %v557
      %v573 = vmul.f32 %v554, %v557
      %v574 = vmul.f32 %v555, %v557
      %v575 = vmul.f32 %v556, %v557
      %v576 = vld [vmem:[#allocation2 + $0x1] sm:$0xff]
      %v577 = vld [vmem:[#allocation2 + $0x9] sm:$0xff]
      %v578 = vld [vmem:[#allocation2 + $0x11] sm:$0xff]
      %v579 = vld [vmem:[#allocation2 + $0x19] sm:$0xff]
      %v580 = vld [vmem:[#allocation2 + $0x21] sm:$0xff]
      %v581 = vld [vmem:[#allocation2 + $0x29] sm:$0xff]
      %v582 = vld [vmem:[#allocation2 + $0x31] sm:$0xff]
      %v583 = vld [vmem:[#allocation2 + $0x39] sm:$0xff]
      %v584 = vld [vmem:[#allocation2 + $0x41] sm:$0xff]
      %v585 = vld [vmem:[#allocation2 + $0x49] sm:$0xff]
      %v586 = vld [vmem:[#allocation2 + $0x51] sm:$0xff]
      %v587 = vld [vmem:[#allocation2 + $0x59] sm:$0xff]
      %v588 = vld [vmem:[#allocation2 + $0x61] sm:$0xff]
      %v589 = vld [vmem:[#allocation2 + $0x69] sm:$0xff]
      %v590 = vld [vmem:[#allocation2 + $0x71] sm:$0xff]
      %v591 = vld [vmem:[#allocation2 + $0x79] sm:$0xff]
      %v592 = vld [vmem:[#allocation2 + $0x81] sm:$0xff]
      %v593 = vld [vmem:[#allocation2 + $0x89] sm:$0xff]
      %v594 = vperm.slane %v532, 1
      %v595 = vmul.f32 %v576, %v594
      %v596 = vmul.f32 %v577, %v594
      %v597 = vmul.f32 %v578, %v594
      %v598 = vmul.f32 %v579, %v594
      %v599 = vmul.f32 %v580, %v594
      %v600 = vmul.f32 %v581, %v594
      %v601 = vmul.f32 %v582, %v594
      %v602 = vmul.f32 %v583, %v594
      %v603 = vmul.f32 %v584, %v594
      %v604 = vmul.f32 %v585, %v594
      %v605 = vmul.f32 %v586, %v594
      %v606 = vmul.f32 %v587, %v594
      %v607 = vmul.f32 %v588, %v594
      %v608 = vmul.f32 %v589, %v594
      %v609 = vmul.f32 %v590, %v594
      %v610 = vmul.f32 %v591, %v594
      %v611 = vmul.f32 %v592, %v594
      %v612 = vmul.f32 %v593, %v594
      %v613 = vadd.f32 %v558, %v595
      %v614 = vadd.f32 %v559, %v596
      %v615 = vadd.f32 %v560, %v597
      %v616 = vadd.f32 %v561, %v598
      %v617 = vadd.f32 %v562, %v599
      %v618 = vadd.f32 %v563, %v600
      %v619 = vadd.f32 %v564, %v601
      %v620 = vadd.f32 %v565, %v602
      %v621 = vadd.f32 %v566, %v603
      %v622 = vadd.f32 %v567, %v604
      %v623 = vadd.f32 %v568, %v605
      %v624 = vadd.f32 %v569, %v606
      %v625 = vadd.f32 %v570, %v607
      %v626 = vadd.f32 %v571, %v608
      %v627 = vadd.f32 %v572, %v609
      %v628 = vadd.f32 %v573, %v610
      %v629 = vadd.f32 %v574, %v611
      %v630 = vadd.f32 %v575, %v612
      %v631 = vld [vmem:[#allocation2 + $0x2] sm:$0xff]
      %v632 = vld [vmem:[#allocation2 + $0xa] sm:$0xff]
      %v633 = vld [vmem:[#allocation2 + $0x12] sm:$0xff]
      %v634 = vld [vmem:[#allocation2 + $0x1a] sm:$0xff]
      %v635 = vld [vmem:[#allocation2 + $0x22] sm:$0xff]
      %v636 = vld [vmem:[#allocation2 + $0x2a] sm:$0xff]
      %v637 = vld [vmem:[#allocation2 + $0x32] sm:$0xff]
      %v638 = vld [vmem:[#allocation2 + $0x3a] sm:$0xff]
      %v639 = vld [vmem:[#allocation2 + $0x42] sm:$0xff]
      %v640 = vld [vmem:[#allocation2 + $0x4a] sm:$0xff]
      %v641 = vld [vmem:[#allocation2 + $0x52] sm:$0xff]
      %v642 = vld [vmem:[#allocation2 + $0x5a] sm:$0xff]
      %v643 = vld [vmem:[#allocation2 + $0x62] sm:$0xff]
      %v644 = vld [vmem:[#allocation2 + $0x6a] sm:$0xff]
      %v645 = vld [vmem:[#allocation2 + $0x72] sm:$0xff]
      %v646 = vld [vmem:[#allocation2 + $0x7a] sm:$0xff]
      %v647 = vld [vmem:[#allocation2 + $0x82] sm:$0xff]
      %v648 = vld [vmem:[#allocation2 + $0x8a] sm:$0xff]
      %v649 = vperm.slane %v532, 2
      %v650 = vmul.f32 %v631, %v649
      %v651 = vmul.f32 %v632, %v649
      %v652 = vmul.f32 %v633, %v649
      %v653 = vmul.f32 %v634, %v649
      %v654 = vmul.f32 %v635, %v649
      %v655 = vmul.f32 %v636, %v649
      %v656 = vmul.f32 %v637, %v649
      %v657 = vmul.f32 %v638, %v649
      %v658 = vmul.f32 %v639, %v649
      %v659 = vmul.f32 %v640, %v649
      %v660 = vmul.f32 %v641, %v649
      %v661 = vmul.f32 %v642, %v649
      %v662 = vmul.f32 %v643, %v649
      %v663 = vmul.f32 %v644, %v649
      %v664 = vmul.f32 %v645, %v649
      %v665 = vmul.f32 %v646, %v649
      %v666 = vmul.f32 %v647, %v649
      %v667 = vmul.f32 %v648, %v649
      %v668 = vadd.f32 %v613, %v650
      %v669 = vadd.f32 %v614, %v651
      %v670 = vadd.f32 %v615, %v652
      %v671 = vadd.f32 %v616, %v653
      %v672 = vadd.f32 %v617, %v654
      %v673 = vadd.f32 %v618, %v655
      %v674 = vadd.f32 %v619, %v656
      %v675 = vadd.f32 %v620, %v657
      %v676 = vadd.f32 %v621, %v658
      %v677 = vadd.f32 %v622, %v659
      %v678 = vadd.f32 %v623, %v660
      %v679 = vadd.f32 %v624, %v661
      %v680 = vadd.f32 %v625, %v662
      %v681 = vadd.f32 %v626, %v663
      %v682 = vadd.f32 %v627, %v664
      %v683 = vadd.f32 %v628, %v665
      %v684 = vadd.f32 %v629, %v666
      %v685 = vadd.f32 %v630, %v667
      %v686 = vld [vmem:[#allocation2 + $0x92] sm:$0xff]
      %v687 = vld [vmem:[#allocation2 + $0x9a] sm:$0xff]
      %v688 = vperm.slane %v532, 3
      %v689 = vmul.f32 %v633, %v688
      %v690 = vmul.f32 %v634, %v688
      %v691 = vmul.f32 %v635, %v688
      %v692 = vmul.f32 %v636, %v688
      %v693 = vmul.f32 %v637, %v688
      %v694 = vmul.f32 %v638, %v688
      %v695 = vmul.f32 %v639, %v688
      %v696 = vmul.f32 %v640, %v688
      %v697 = vmul.f32 %v641, %v688
      %v698 = vmul.f32 %v642, %v688
      %v699 = vmul.f32 %v643, %v688
      %v700 = vmul.f32 %v644, %v688
      %v701 = vmul.f32 %v645, %v688
      %v702 = vmul.f32 %v646, %v688
      %v703 = vmul.f32 %v647, %v688
      %v704 = vmul.f32 %v648, %v688
      %v705 = vmul.f32 %v686, %v688
      %v706 = vmul.f32 %v687, %v688
      %v707 = vadd.f32 %v668, %v689
      %v708 = vadd.f32 %v669, %v690
      %v709 = vadd.f32 %v670, %v691
      %v710 = vadd.f32 %v671, %v692
      %v711 = vadd.f32 %v672, %v693
      %v712 = vadd.f32 %v673, %v694
      %v713 = vadd.f32 %v674, %v695
      %v714 = vadd.f32 %v675, %v696
      %v715 = vadd.f32 %v676, %v697
      %v716 = vadd.f32 %v677, %v698
      %v717 = vadd.f32 %v678, %v699
      %v718 = vadd.f32 %v679, %v700
      %v719 = vadd.f32 %v680, %v701
      %v720 = vadd.f32 %v681, %v702
      %v721 = vadd.f32 %v682, %v703
      %v722 = vadd.f32 %v683, %v704
      %v723 = vadd.f32 %v684, %v705
      %v724 = vadd.f32 %v685, %v706
      %v725 = vld [vmem:[#allocation2 + $0x13] sm:$0xff]
      %v726 = vld [vmem:[#allocation2 + $0x1b] sm:$0xff]
      %v727 = vld [vmem:[#allocation2 + $0x23] sm:$0xff]
      %v728 = vld [vmem:[#allocation2 + $0x2b] sm:$0xff]
      %v729 = vld [vmem:[#allocation2 + $0x33] sm:$0xff]
      %v730 = vld [vmem:[#allocation2 + $0x3b] sm:$0xff]
      %v731 = vld [vmem:[#allocation2 + $0x43] sm:$0xff]
      %v732 = vld [vmem:[#allocation2 + $0x4b] sm:$0xff]
      %v733 = vld [vmem:[#allocation2 + $0x53] sm:$0xff]
      %v734 = vld [vmem:[#allocation2 + $0x5b] sm:$0xff]
      %v735 = vld [vmem:[#allocation2 + $0x63] sm:$0xff]
      %v736 = vld [vmem:[#allocation2 + $0x6b] sm:$0xff]
      %v737 = vld [vmem:[#allocation2 + $0x73] sm:$0xff]
      %v738 = vld [vmem:[#allocation2 + $0x7b] sm:$0xff]
      %v739 = vld [vmem:[#allocation2 + $0x83] sm:$0xff]
      %v740 = vld [vmem:[#allocation2 + $0x8b] sm:$0xff]
      %v741 = vld [vmem:[#allocation2 + $0x93] sm:$0xff]
      %v742 = vld [vmem:[#allocation2 + $0x9b] sm:$0xff]
      %v743 = vperm.slane %v532, 4
      %v744 = vmul.f32 %v725, %v743
      %v745 = vmul.f32 %v726, %v743
      %v746 = vmul.f32 %v727, %v743
      %v747 = vmul.f32 %v728, %v743
      %v748 = vmul.f32 %v729, %v743
      %v749 = vmul.f32 %v730, %v743
      %v750 = vmul.f32 %v731, %v743
      %v751 = vmul.f32 %v732, %v743
      %v752 = vmul.f32 %v733, %v743
      %v753 = vmul.f32 %v734, %v743
      %v754 = vmul.f32 %v735, %v743
      %v755 = vmul.f32 %v736, %v743
      %v756 = vmul.f32 %v737, %v743
      %v757 = vmul.f32 %v738, %v743
      %v758 = vmul.f32 %v739, %v743
      %v759 = vmul.f32 %v740, %v743
      %v760 = vmul.f32 %v741, %v743
      %v761 = vmul.f32 %v742, %v743
      %v762 = vadd.f32 %v707, %v744
      %v763 = vadd.f32 %v708, %v745
      %v764 = vadd.f32 %v709, %v746
      %v765 = vadd.f32 %v710, %v747
      %v766 = vadd.f32 %v711, %v748
      %v767 = vadd.f32 %v712, %v749
      %v768 = vadd.f32 %v713, %v750
      %v769 = vadd.f32 %v714, %v751
      %v770 = vadd.f32 %v715, %v752
      %v771 = vadd.f32 %v716, %v753
      %v772 = vadd.f32 %v717, %v754
      %v773 = vadd.f32 %v718, %v755
      %v774 = vadd.f32 %v719, %v756
      %v775 = vadd.f32 %v720, %v757
      %v776 = vadd.f32 %v721, %v758
      %v777 = vadd.f32 %v722, %v759
      %v778 = vadd.f32 %v723, %v760
      %v779 = vadd.f32 %v724, %v761
      %v780 = vld [vmem:[#allocation2 + $0x14] sm:$0xff]
      %v781 = vld [vmem:[#allocation2 + $0x1c] sm:$0xff]
      %v782 = vld [vmem:[#allocation2 + $0x24] sm:$0xff]
      %v783 = vld [vmem:[#allocation2 + $0x2c] sm:$0xff]
      %v784 = vld [vmem:[#allocation2 + $0x34] sm:$0xff]
      %v785 = vld [vmem:[#allocation2 + $0x3c] sm:$0xff]
      %v786 = vld [vmem:[#allocation2 + $0x44] sm:$0xff]
      %v787 = vld [vmem:[#allocation2 + $0x4c] sm:$0xff]
      %v788 = vld [vmem:[#allocation2 + $0x54] sm:$0xff]
      %v789 = vld [vmem:[#allocation2 + $0x5c] sm:$0xff]
      %v790 = vld [vmem:[#allocation2 + $0x64] sm:$0xff]
      %v791 = vld [vmem:[#allocation2 + $0x6c] sm:$0xff]
      %v792 = vld [vmem:[#allocation2 + $0x74] sm:$0xff]
      %v793 = vld [vmem:[#allocation2 + $0x7c] sm:$0xff]
      %v794 = vld [vmem:[#allocation2 + $0x84] sm:$0xff]
      %v795 = vld [vmem:[#allocation2 + $0x8c] sm:$0xff]
      %v796 = vld [vmem:[#allocation2 + $0x94] sm:$0xff]
      %v797 = vld [vmem:[#allocation2 + $0x9c] sm:$0xff]
      %v798 = vperm.slane %v532, 5
      %v799 = vmul.f32 %v780, %v798
      %v800 = vmul.f32 %v781, %v798
      %v801 = vmul.f32 %v782, %v798
      %v802 = vmul.f32 %v783, %v798
      %v803 = vmul.f32 %v784, %v798
      %v804 = vmul.f32 %v785, %v798
      %v805 = vmul.f32 %v786, %v798
      %v806 = vmul.f32 %v787, %v798
      %v807 = vmul.f32 %v788, %v798
      %v808 = vmul.f32 %v789, %v798
      %v809 = vmul.f32 %v790, %v798
      %v810 = vmul.f32 %v791, %v798
      %v811 = vmul.f32 %v792, %v798
      %v812 = vmul.f32 %v793, %v798
      %v813 = vmul.f32 %v794, %v798
      %v814 = vmul.f32 %v795, %v798
      %v815 = vmul.f32 %v796, %v798
      %v816 = vmul.f32 %v797, %v798
      %v817 = vadd.f32 %v762, %v799
      %v818 = vadd.f32 %v763, %v800
      %v819 = vadd.f32 %v764, %v801
      %v820 = vadd.f32 %v765, %v802
      %v821 = vadd.f32 %v766, %v803
      %v822 = vadd.f32 %v767, %v804
      %v823 = vadd.f32 %v768, %v805
      %v824 = vadd.f32 %v769, %v806
      %v825 = vadd.f32 %v770, %v807
      %v826 = vadd.f32 %v771, %v808
      %v827 = vadd.f32 %v772, %v809
      %v828 = vadd.f32 %v773, %v810
      %v829 = vadd.f32 %v774, %v811
      %v830 = vadd.f32 %v775, %v812
      %v831 = vadd.f32 %v776, %v813
      %v832 = vadd.f32 %v777, %v814
      %v833 = vadd.f32 %v778, %v815
      %v834 = vadd.f32 %v779, %v816
      %v835 = vld [vmem:[#allocation2 + $0xa4] sm:$0xff]
      %v836 = vld [vmem:[#allocation2 + $0xac] sm:$0xff]
      %v837 = vperm.slane %v532, 6
      %v838 = vmul.f32 %v782, %v837
      %v839 = vmul.f32 %v783, %v837
      %v840 = vmul.f32 %v784, %v837
      %v841 = vmul.f32 %v785, %v837
      %v842 = vmul.f32 %v786, %v837
      %v843 = vmul.f32 %v787, %v837
      %v844 = vmul.f32 %v788, %v837
      %v845 = vmul.f32 %v789, %v837
      %v846 = vmul.f32 %v790, %v837
      %v847 = vmul.f32 %v791, %v837
      %v848 = vmul.f32 %v792, %v837
      %v849 = vmul.f32 %v793, %v837
      %v850 = vmul.f32 %v794, %v837
      %v851 = vmul.f32 %v795, %v837
      %v852 = vmul.f32 %v796, %v837
      %v853 = vmul.f32 %v797, %v837
      %v854 = vmul.f32 %v835, %v837
      %v855 = vmul.f32 %v836, %v837
      %v856 = vadd.f32 %v817, %v838
      %v857 = vadd.f32 %v818, %v839
      %v858 = vadd.f32 %v819, %v840
      %v859 = vadd.f32 %v820, %v841
      %v860 = vadd.f32 %v821, %v842
      %v861 = vadd.f32 %v822, %v843
      %v862 = vadd.f32 %v823, %v844
      %v863 = vadd.f32 %v824, %v845
      %v864 = vadd.f32 %v825, %v846
      %v865 = vadd.f32 %v826, %v847
      %v866 = vadd.f32 %v827, %v848
      %v867 = vadd.f32 %v828, %v849
      %v868 = vadd.f32 %v829, %v850
      %v869 = vadd.f32 %v830, %v851
      %v870 = vadd.f32 %v831, %v852
      %v871 = vadd.f32 %v832, %v853
      %v872 = vadd.f32 %v833, %v854
      %v873 = vadd.f32 %v834, %v855
      %v874 = vld [vmem:[#allocation2 + $0x25] sm:$0xff]
      %v875 = vld [vmem:[#allocation2 + $0x2d] sm:$0xff]
      %v876 = vld [vmem:[#allocation2 + $0x35] sm:$0xff]
      %v877 = vld [vmem:[#allocation2 + $0x3d] sm:$0xff]
      %v878 = vld [vmem:[#allocation2 + $0x45] sm:$0xff]
      %v879 = vld [vmem:[#allocation2 + $0x4d] sm:$0xff]
      %v880 = vld [vmem:[#allocation2 + $0x55] sm:$0xff]
      %v881 = vld [vmem:[#allocation2 + $0x5d] sm:$0xff]
      %v882 = vld [vmem:[#allocation2 + $0x65] sm:$0xff]
      %v883 = vld [vmem:[#allocation2 + $0x6d] sm:$0xff]
      %v884 = vld [vmem:[#allocation2 + $0x75] sm:$0xff]
      %v885 = vld [vmem:[#allocation2 + $0x7d] sm:$0xff]
      %v886 = vld [vmem:[#allocation2 + $0x85] sm:$0xff]
      %v887 = vld [vmem:[#allocation2 + $0x8d] sm:$0xff]
      %v888 = vld [vmem:[#allocation2 + $0x95] sm:$0xff]
      %v889 = vld [vmem:[#allocation2 + $0x9d] sm:$0xff]
      %v890 = vld [vmem:[#allocation2 + $0xa5] sm:$0xff]
      %v891 = vld [vmem:[#allocation2 + $0xad] sm:$0xff]
      %v892 = vperm.slane %v532, 7
      %v893 = vmul.f32 %v874, %v892
      %v894 = vmul.f32 %v875, %v892
      %v895 = vmul.f32 %v876, %v892
      %v896 = vmul.f32 %v877, %v892
      %v897 = vmul.f32 %v878, %v892
      %v898 = vmul.f32 %v879, %v892
      %v899 = vmul.f32 %v880, %v892
      %v900 = vmul.f32 %v881, %v892
      %v901 = vmul.f32 %v882, %v892
      %v902 = vmul.f32 %v883, %v892
      %v903 = vmul.f32 %v884, %v892
      %v904 = vmul.f32 %v885, %v892
      %v905 = vmul.f32 %v886, %v892
      %v906 = vmul.f32 %v887, %v892
      %v907 = vmul.f32 %v888, %v892
      %v908 = vmul.f32 %v889, %v892
      %v909 = vmul.f32 %v890, %v892
      %v910 = vmul.f32 %v891, %v892
      %v911 = vadd.f32 %v856, %v893
      %v912 = vadd.f32 %v857, %v894
      %v913 = vadd.f32 %v858, %v895
      %v914 = vadd.f32 %v859, %v896
      %v915 = vadd.f32 %v860, %v897
      %v916 = vadd.f32 %v861, %v898
      %v917 = vadd.f32 %v862, %v899
      %v918 = vadd.f32 %v863, %v900
      %v919 = vadd.f32 %v864, %v901
      %v920 = vadd.f32 %v865, %v902
      %v921 = vadd.f32 %v866, %v903
      %v922 = vadd.f32 %v867, %v904
      %v923 = vadd.f32 %v868, %v905
      %v924 = vadd.f32 %v869, %v906
      %v925 = vadd.f32 %v870, %v907
      %v926 = vadd.f32 %v871, %v908
      %v927 = vadd.f32 %v872, %v909
      %v928 = vadd.f32 %v873, %v910
      %v929 = vld [vmem:[#allocation2 + $0x26] sm:$0xff]
      %v930 = vld [vmem:[#allocation2 + $0x2e] sm:$0xff]
      %v931 = vld [vmem:[#allocation2 + $0x36] sm:$0xff]
      %v932 = vld [vmem:[#allocation2 + $0x3e] sm:$0xff]
      %v933 = vld [vmem:[#allocation2 + $0x46] sm:$0xff]
      %v934 = vld [vmem:[#allocation2 + $0x4e] sm:$0xff]
      %v935 = vld [vmem:[#allocation2 + $0x56] sm:$0xff]
      %v936 = vld [vmem:[#allocation2 + $0x5e] sm:$0xff]
      %v937 = vld [vmem:[#allocation2 + $0x66] sm:$0xff]
      %v938 = vld [vmem:[#allocation2 + $0x6e] sm:$0xff]
      %v939 = vld [vmem:[#allocation2 + $0x76] sm:$0xff]
      %v940 = vld [vmem:[#allocation2 + $0x7e] sm:$0xff]
      %v941 = vld [vmem:[#allocation2 + $0x86] sm:$0xff]
      %v942 = vld [vmem:[#allocation2 + $0x8e] sm:$0xff]
      %v943 = vld [vmem:[#allocation2 + $0x96] sm:$0xff]
      %v944 = vld [vmem:[#allocation2 + $0x9e] sm:$0xff]
      %v945 = vld [vmem:[#allocation2 + $0xa6] sm:$0xff]
      %v946 = vld [vmem:[#allocation2 + $0xae] sm:$0xff]
      %v947 = vperm.slane %v533, 0
      %v948 = vmul.f32 %v929, %v947
      %v949 = vmul.f32 %v930, %v947
      %v950 = vmul.f32 %v931, %v947
      %v951 = vmul.f32 %v932, %v947
      %v952 = vmul.f32 %v933, %v947
      %v953 = vmul.f32 %v934, %v947
      %v954 = vmul.f32 %v935, %v947
      %v955 = vmul.f32 %v936, %v947
      %v956 = vmul.f32 %v937, %v947
      %v957 = vmul.f32 %v938, %v947
      %v958 = vmul.f32 %v939, %v947
      %v959 = vmul.f32 %v940, %v947
      %v960 = vmul.f32 %v941, %v947
      %v961 = vmul.f32 %v942, %v947
      %v962 = vmul.f32 %v943, %v947
      %v963 = vmul.f32 %v944, %v947
      %v964 = vmul.f32 %v945, %v947
      %v965 = vmul.f32 %v946, %v947
      %v966 = vadd.f32 %v911, %v948
      %v967 = vadd.f32 %v912, %v949
      %v968 = vadd.f32 %v913, %v950
      %v969 = vadd.f32 %v914, %v951
      %v970 = vadd.f32 %v915, %v952
      %v971 = vadd.f32 %v916, %v953
      %v972 = vadd.f32 %v917, %v954
      %v973 = vadd.f32 %v918, %v955
      %v974 = vadd.f32 %v919, %v956
      %v975 = vadd.f32 %v920, %v957
      %v976 = vadd.f32 %v921, %v958
      %v977 = vadd.f32 %v922, %v959
      %v978 = vadd.f32 %v923, %v960
      %v979 = vadd.f32 %v924, %v961
      %v980 = vadd.f32 %v925, %v962
      %v981 = vadd.f32 %v926, %v963
      %v982 = vadd.f32 %v927, %v964
      %v983 = vadd.f32 %v928, %v965
      %v985 = vperm.slane %v534, 0
      %v987 = vadd.f32 %v966, %v985
      %v988 = vadd.f32 %v967, %v985
      %v989 = vadd.f32 %v968, %v985
      %v990 = vadd.f32 %v969, %v985
      %v991 = vadd.f32 %v970, %v985
      %v992 = vadd.f32 %v971, %v985
      %v993 = vadd.f32 %v972, %v985
      %v994 = vadd.f32 %v973, %v985
      %v995 = vadd.f32 %v974, %v985
      %v996 = vadd.f32 %v975, %v985
      %v997 = vadd.f32 %v976, %v985
      %v998 = vadd.f32 %v977, %v985
      %v999 = vadd.f32 %v978, %v985
      %v1000 = vadd.f32 %v979, %v985
      %v1001 = vadd.f32 %v980, %v985
      %v1002 = vadd.f32 %v981, %v985
      %v1003 = vadd.f32 %v982, %v985
      %v1004 = vadd.f32 %v983, %v985
      %v1005 = vmax.f32 %v987, 0.0
      %v1006 = vmax.f32 %v988, 0.0
      %v1007 = vmax.f32 %v989, 0.0
      %v1008 = vmax.f32 %v990, 0.0
      %v1009 = vmax.f32 %v991, 0.0
      %v1010 = vmax.f32 %v992, 0.0
      %v1011 = vmax.f32 %v993, 0.0
      %v1012 = vmax.f32 %v994, 0.0
      %v1013 = vmax.f32 %v995, 0.0
      %v1014 = vmax.f32 %v996, 0.0
      %v1015 = vmax.f32 %v997, 0.0
      %v1016 = vmax.f32 %v998, 0.0
      %v1017 = vmax.f32 %v999, 0.0
      %v1018 = vmax.f32 %v1000, 0.0
      %v1019 = vmax.f32 %v1001, 0.0
      %v1020 = vmax.f32 %v1002, 0.0
      %v1021 = vmax.f32 %v1003, 0.0
      %v1022 = vmax.f32 %v1004, 0.0
      %v1023 = vmin.f32 %v1005, 6.0
      %v1024 = vmin.f32 %v1006, 6.0
      %v1025 = vmin.f32 %v1007, 6.0
      %v1026 = vmin.f32 %v1008, 6.0
      %v1027 = vmin.f32 %v1009, 6.0
      %v1028 = vmin.f32 %v1010, 6.0
      %v1029 = vmin.f32 %v1011, 6.0
      %v1030 = vmin.f32 %v1012, 6.0
      %v1031 = vmin.f32 %v1013, 6.0
      %v1032 = vmin.f32 %v1014, 6.0
      %v1033 = vmin.f32 %v1015, 6.0
      %v1034 = vmin.f32 %v1016, 6.0
      %v1035 = vmin.f32 %v1017, 6.0
      %v1036 = vmin.f32 %v1018, 6.0
      %v1037 = vmin.f32 %v1019, 6.0
      %v1038 = vmin.f32 %v1020, 6.0
      %v1039 = vmin.f32 %v1021, 6.0
      %v1040 = vmin.f32 %v1022, 6.0
      %v1042 = vperm.slane %v538, 0
      %v1045 = vsel %vm506, %v1023, 0
      %v1048 = vsel %vm506, %v1024, 0
      %v1051 = vsel %vm506, %v1025, 0
      %v1054 = vsel %vm506, %v1026, 0
      %v1057 = vsel %vm506, %v1027, 0
      %v1060 = vsel %vm506, %v1028, 0
      %v1063 = vsel %vm506, %v1029, 0
      %v1066 = vsel %vm506, %v1030, 0
      %v1069 = vsel %vm506, %v1031, 0
      %v1072 = vsel %vm506, %v1032, 0
      %v1075 = vsel %vm506, %v1033, 0
      %v1078 = vsel %vm506, %v1034, 0
      %v1081 = vsel %vm506, %v1035, 0
      %v1084 = vsel %vm506, %v1036, 0
      %v1087 = vsel %vm506, %v1037, 0
      %v1090 = vsel %vm506, %v1038, 0
      %v1093 = vsel %vm506, %v1039, 0
      %v1096 = vsel %vm506, %v1040, 0
      %1098 = vmatpush.msra.mxu0 0.0
      %1099 = vmatpush.msra.mxu0 0.0
      %1100 = vmatpush.msra.mxu0 0.0
      %1101 = vmatpush.msra.mxu0 0.0
      %1102 = vmatpush.msra.mxu0 0.0
      %1103 = vmatpush.msra.mxu0 0.0
      %1104 = vmatpush.msra.mxu0 0.0
      %1105 = vmatpush.msra.mxu0 0.0
      %1106 = vmatpush.msra.mxu0 0.0
      %1107 = vmatpush.msra.mxu0 0.0
      %1108 = vmatpush.msra.mxu0 0.0
      %1109 = vmatpush.msra.mxu0 0.0
      %1110 = vmatpush.msra.mxu0 0.0
      %1111 = vmatpush.msra.mxu0 %v537
      %1112 = vmatpush.msra.mxu0 %v536
      %1113 = vmatpush.msra.mxu0 %v535
      %1114 = vmatmul.f32.gmra.mxu0 %v1045
      %v1115 = vpop.f32.mrf.mxu0
      %v1116 = vadd.f32 %v1042, %v1115
      %1117 = vmatmul.f32.gmra.mxu0 %v1048
      %v1118 = vpop.f32.mrf.mxu0
      %v1119 = vadd.f32 %v1042, %v1118
      %1120 = vmatmul.f32.gmra.mxu0 %v1051
      %v1121 = vpop.f32.mrf.mxu0
      %v1122 = vadd.f32 %v1042, %v1121
      %1123 = vmatmul.f32.gmra.mxu0 %v1054
      %v1124 = vpop.f32.mrf.mxu0
      %v1125 = vadd.f32 %v1042, %v1124
      %1126 = vmatmul.f32.gmra.mxu0 %v1057
      %v1127 = vpop.f32.mrf.mxu0
      %v1128 = vadd.f32 %v1042, %v1127
      %1129 = vmatmul.f32.gmra.mxu0 %v1060
      %v1130 = vpop.f32.mrf.mxu0
      %v1131 = vadd.f32 %v1042, %v1130
      %1132 = vmatmul.f32.gmra.mxu0 %v1063
      %v1133 = vpop.f32.mrf.mxu0
      %v1134 = vadd.f32 %v1042, %v1133
      %1135 = vmatmul.f32.gmra.mxu0 %v1066
      %v1136 = vpop.f32.mrf.mxu0
      %v1137 = vadd.f32 %v1042, %v1136
      %1138 = vmatmul.f32.gmra.mxu0 %v1069
      %v1139 = vpop.f32.mrf.mxu0
      %v1140 = vadd.f32 %v1042, %v1139
      %1141 = vmatmul.f32.gmra.mxu0 %v1072
      %v1142 = vpop.f32.mrf.mxu0
      %v1143 = vadd.f32 %v1042, %v1142
      %1144 = vmatmul.f32.gmra.mxu0 %v1075
      %v1145 = vpop.f32.mrf.mxu0
      %v1146 = vadd.f32 %v1042, %v1145
      %1147 = vmatmul.f32.gmra.mxu0 %v1078
      %v1148 = vpop.f32.mrf.mxu0
      %v1149 = vadd.f32 %v1042, %v1148
      %1150 = vmatmul.f32.gmra.mxu0 %v1081
      %v1151 = vpop.f32.mrf.mxu0
      %v1152 = vadd.f32 %v1042, %v1151
      %1153 = vmatmul.f32.gmra.mxu0 %v1084
      %v1154 = vpop.f32.mrf.mxu0
      %v1155 = vadd.f32 %v1042, %v1154
      %1156 = vmatmul.f32.gmra.mxu0 %v1087
      %v1157 = vpop.f32.mrf.mxu0
      %v1158 = vadd.f32 %v1042, %v1157
      %1159 = vmatmul.f32.gmra.mxu0 %v1090
      %v1160 = vpop.f32.mrf.mxu0
      %v1161 = vadd.f32 %v1042, %v1160
      %1162 = vmatmul.f32.gmra.mxu0 %v1093
      %v1163 = vpop.f32.mrf.mxu0
      %v1164 = vadd.f32 %v1042, %v1163
      %1165 = vmatmul.f32.gmra.mxu0 %v1096
      %v1166 = vpop.f32.mrf.mxu0
      %v1167 = vadd.f32 %v1042, %v1166
      %1168 = vdwg.mxu0
      %s1169 = sadd.s32 %s274, 19
      %s1170 = scalar_lea.vmem %s264, %s1169
      %v1171 = vld [vmem:[%s1170] sm:$0xff]
      %v1172 = vld [vmem:[%s1170 + $0x8] sm:$0xff]
      %v1173 = vld [vmem:[%s1170 + $0x10] sm:$0xff]
      %v1174 = vld [vmem:[%s1170 + $0x18] sm:$0xff]
      %v1175 = vld [vmem:[%s1170 + $0x20] sm:$0xff]
      %v1176 = vld [vmem:[%s1170 + $0x28] sm:$0xff]
      %v1177 = vld [vmem:[%s1170 + $0x30] sm:$0xff]
      %v1178 = vld [vmem:[%s1170 + $0x38] sm:$0xff]
      %v1179 = vld [vmem:[%s1170 + $0x40] sm:$0xff]
      %v1180 = vld [vmem:[%s1170 + $0x48] sm:$0xff]
      %v1181 = vld [vmem:[%s1170 + $0x50] sm:$0xff]
      %v1182 = vld [vmem:[%s1170 + $0x58] sm:$0xff]
      %v1183 = vld [vmem:[%s1170 + $0x60] sm:$0xff]
      %v1184 = vld [vmem:[%s1170 + $0x68] sm:$0xff]
      %v1185 = vld [vmem:[%s1170 + $0x70] sm:$0xff]
      %v1186 = vld [vmem:[%s1170 + $0x78] sm:$0xff]
      %v1187 = vld [vmem:[%s1170 + $0x80] sm:$0xff]
      %v1188 = vld [vmem:[%s1170 + $0x88] sm:$0xff]
      %v1189 = vadd.f32 %v1116, %v1171
      %v1190 = vadd.f32 %v1119, %v1172
      %v1191 = vadd.f32 %v1122, %v1173
      %v1192 = vadd.f32 %v1125, %v1174
      %v1193 = vadd.f32 %v1128, %v1175
      %v1194 = vadd.f32 %v1131, %v1176
      %v1195 = vadd.f32 %v1134, %v1177
      %v1196 = vadd.f32 %v1137, %v1178
      %v1197 = vadd.f32 %v1140, %v1179
      %v1198 = vadd.f32 %v1143, %v1180
      %v1199 = vadd.f32 %v1146, %v1181
      %v1200 = vadd.f32 %v1149, %v1182
      %v1201 = vadd.f32 %v1152, %v1183
      %v1202 = vadd.f32 %v1155, %v1184
      %v1203 = vadd.f32 %v1158, %v1185
      %v1204 = vadd.f32 %v1161, %v1186
      %v1205 = vadd.f32 %v1164, %v1187
      %v1206 = vadd.f32 %v1167, %v1188
      %vm1207 = vcmask 31744
      %1208 = vst.msk [vmem:[%s273] sm:$0xff] %vm1207, %v1189
      %1209 = vst.msk [vmem:[%s273 + $0x8] sm:$0xff] %vm1207, %v1190
      %1210 = vst.msk [vmem:[%s273 + $0x10] sm:$0xff] %vm1207, %v1191
      %1211 = vst.msk [vmem:[%s273 + $0x18] sm:$0xff] %vm1207, %v1192
      %1212 = vst.msk [vmem:[%s273 + $0x20] sm:$0xff] %vm1207, %v1193
      %1213 = vst.msk [vmem:[%s273 + $0x28] sm:$0xff] %vm1207, %v1194
      %1214 = vst.msk [vmem:[%s273 + $0x30] sm:$0xff] %vm1207, %v1195
      %1215 = vst.msk [vmem:[%s273 + $0x38] sm:$0xff] %vm1207, %v1196
      %1216 = vst.msk [vmem:[%s273 + $0x40] sm:$0xff] %vm1207, %v1197
      %1217 = vst.msk [vmem:[%s273 + $0x48] sm:$0xff] %vm1207, %v1198
      %1218 = vst.msk [vmem:[%s273 + $0x50] sm:$0xff] %vm1207, %v1199
      %1219 = vst.msk [vmem:[%s273 + $0x58] sm:$0xff] %vm1207, %v1200
      %1220 = vst.msk [vmem:[%s273 + $0x60] sm:$0xff] %vm1207, %v1201
      %1221 = vst.msk [vmem:[%s273 + $0x68] sm:$0xff] %vm1207, %v1202
      %1222 = vst.msk [vmem:[%s273 + $0x70] sm:$0xff] %vm1207, %v1203
      %1223 = vst.msk [vmem:[%s273 + $0x78] sm:$0xff] %vm1207, %v1204
      %1224 = vst.msk [vmem:[%s273 + $0x80] sm:$0xff] %vm1207, %v1205
      %1225 = vst.msk [vmem:[%s273 + $0x88] sm:$0xff] %vm1207, %v1206
      %p1226 = scmp.lt.s32.totalorder %s21, 1
      %s1227 = scalar_select %p1226, %s21, 1
      %p1228 = scmp.lt.s32.totalorder %s22, 1
      %s1229 = scalar_select %p1228, %s22, 1
      %s1230 = smul.addr %s1229, 18
      %s1231 = smul.addr %s1227, 36
      %s1232 = sadd.s32 %s1230, %s1231
      %s1233 = smul.addr %s1232, 8
      %s1234 = scalar_lea.vmem %s6, %s1233
      // Predicated region
      $region45: #{tpu_custom_call.1} parent=43 // pred_check
        %p1235 = pneg %p180
      $region46: #{tpu_custom_call.1} parent=43 // pred_check_branch
        %1237 = sbr.rel (%p1235) target = $region48
      $region47: #{tpu_custom_call.1} parent=43 // pred_region
        _
      $region48: #{tpu_custom_call.1} parent=43 // pred_fallthru
        _
    $region44: #{tpu_custom_call.1} parent=5 // pred_fallthru
      _
    %p1238 = scmp.le.s32.totalorder 2, %s12
    // Predicated region
    $region49: #{tpu_custom_call.1} parent=5 // pred_check
      %p1239 = pneg %p1238
    $region50: #{tpu_custom_call.1} parent=5 // pred_check_branch
      %1241 = sbr.rel (%p1239) target = $region52
    $region51: #{tpu_custom_call.1} parent=5 // pred_region
      %s1242 = ssub.s32 %s12, 2
      // Predicated region
      $region53: #{tpu_custom_call.1} parent=51 // pred_check
        %p1243 = pneg %p186
      $region54: #{tpu_custom_call.1} parent=51 // pred_check_branch
        %1245 = sbr.rel (%p1243) target = $region56
      $region55: #{tpu_custom_call.1} parent=51 // pred_region
        %p1246 = scmp.lt.s32.totalorder %s23, 1
        %s1247 = scalar_select %p1246, %s23, 1
        %p1248 = scmp.lt.s32.totalorder %s24, 1
        %s1249 = scalar_select %p1248, %s24, 1
        %s1250 = smul.addr %s1249, 18
        %s1251 = smul.addr %s1247, 36
        %s1252 = sadd.s32 %s1250, %s1251
        %s1253 = smul.addr %s1252, 8
        %s1254 = scalar_lea.vmem %s6, %s1253
      $region56: #{tpu_custom_call.1} parent=51 // pred_fallthru
        _
    $region52: #{tpu_custom_call.1} parent=5 // pred_fallthru
      _
  $region6: #{tpu_custom_call.1} parent=0 // loop_footer
    %s16 = sadd.s32 1, %s12
  $region7: #{tpu_custom_call.1} parent=0 // loop_footer_branch
    %11 = sbr.rel target = $region3
  $region8: #{tpu_custom_call.1} parent=0 // loop_exit
    _

</llo_original>
